<compile_context>
chip_gen: v5e
topology: v5e:2x2
jax: 0.10.0
libtpu: 0.0.40
codegen_flags: <defaults>
</compile_context>

<pallas_src>
import jax
import jax.numpy as jnp
from jax.experimental import pallas as pl
from jax.experimental.pallas import tpu as pltpu

L = 200            # conv input length (fc1 expects 16*100 -> L must be 200)
N_CH = 16          # conv out channels
POOL = 100         # length after MaxPool1d(2, 2)
PAD_POOL = 128     # lane-padded per-channel slab width
K_FUSED = N_CH * PAD_POOL          # 2048 (fc1 contraction, slab layout)
K_CONV = 3 * PAD_POOL              # 384  (block-diag conv matmul contraction)
H1 = 64            # fc1 out
OUT = 10           # fc2 out
OUT_PAD = 128      # lane-dense output width (wrapper slices [:, :OUT])
MAX_TILE_B = 512   # rows per grid step (multiple of 8)

# The conv1d zero-padding at both sequence ends is realised by the zero pad
# lanes (POOL..PAD_POOL-1) of the even/odd slabs wrapping around in the rolls,
# so PAD_POOL must stay strictly larger than POOL.
assert PAD_POOL > POOL


def _round_up(n, m):
    return ((n + m - 1) // m) * m


def _device_kind():
    try:
        return jax.devices()[0].device_kind.lower()
    except Exception:
        return ""


_KIND = _device_kind()
# v6e/v7x: MXU is >95% idle while the VPU does the conv -> offload it.
# v5e (197 TF/s bf16, no bf16 VPU) keeps the VPU conv.
USE_MXU_CONV = ("v6" in _KIND) or ("v7" in _KIND)
# v7x has 2 TensorCores/chip; keep >=2 grid steps so "parallel" shards them.
MIN_GRID_STEPS = 2 if "v7" in _KIND else 1


def _rolled_inputs(x_even_ref, x_odd_ref):
    # Load bf16 slabs, upcast to f32, build conv neighbour shifts with XLU
    # rolls.  The wrapped lane is a zero pad lane -> conv1d padding=1 at both
    # sequence ends (relies on PAD_POOL > POOL, asserted above).
    x_even = x_even_ref[...].astype(jnp.float32)                    # x[:, 2p]
    x_odd = x_odd_ref[...].astype(jnp.float32)                      # x[:, 2p+1]
    x_odd_prev = pltpu.roll(x_odd, shift=1, axis=1)                 # x[:, 2p-1]
    x_even_next = pltpu.roll(x_even, shift=PAD_POOL - 1, axis=1)    # x[:, 2p+2]
    return x_even, x_odd, x_odd_prev, x_even_next


def social_cnn_vpu_kernel(x_even_ref, x_odd_ref, convw_ref, convb_ref,
                          w1p_ref, b1_ref, w2t_ref, b2_ref, out_ref,
                          pooled_ref):
    x_even, x_odd, x_odd_prev, x_even_next = _rolled_inputs(x_even_ref, x_odd_ref)

    # 16 conv channels, fully unrolled (pure VPU work).  VALU is the binding
    # slot; vld keeps ~1.6x headroom at TILE_B=512 so any spill reloads of the
    # rolled slabs stay hidden under the VALU cycles.
    for c in range(N_CH):
        wk0 = convw_ref[3 * c + 0]
        wk1 = convw_ref[3 * c + 1]
        wk2 = convw_ref[3 * c + 2]
        bc = convb_ref[c]
        # Raw conv sums at even / odd positions (no bias / ReLU yet).
        even_raw = wk0 * x_odd_prev + wk1 * x_even + wk2 * x_odd
        odd_raw = wk0 * x_even + wk1 * x_odd + wk2 * x_even_next
        # MaxPool1d(2,2) + bias + ReLU fused via
        #   max(ReLU(a+b), ReLU(c+b)) == ReLU(max(a,c) + b).
        pooled = jnp.maximum(jnp.maximum(even_raw, odd_raw) + bc, 0.0)
        # Lane-aligned full-width store into the fused-matmul scratch slab.
        # Lanes 100..127 hold junk-but-finite values; the matching w1p rows
        # are zero so they contribute nothing to fc1.
        pooled_ref[:, c * PAD_POOL:(c + 1) * PAD_POOL] = pooled.astype(jnp.bfloat16)

    # fc1: single fused (TILE_B, 2048) @ (2048, 64) bf16 matmul, f32 accumulate.
    h = jnp.dot(pooled_ref[...], w1p_ref[...], preferred_element_type=jnp.float32)
    h = jnp.maximum(h + b1_ref[...], 0.0)
    # fc2: (TILE_B, 64) @ (64, 128) — weight padded to 128 output lanes so the
    # final store is lane-dense (no masked vst); wrapper slices [:, :OUT].
    out = jnp.dot(h.astype(jnp.bfloat16), w2t_ref[...],
                  preferred_element_type=jnp.float32) + b2_ref[...]
    out_ref[...] = out.astype(out_ref.dtype)


def social_cnn_mxu_kernel(x_even_ref, x_odd_ref, convb_slab_ref, wconv_ref,
                          w1p_ref, b1_ref, w2t_ref, b2_ref, out_ref):
    x_even, x_odd, x_odd_prev, x_even_next = _rolled_inputs(x_even_ref, x_odd_ref)

    # Conv on the MXU: two (TILE_B, 384) @ (384, 2048) block-diagonal bf16
    # matmuls give the even/odd conv sums directly in the channel-slab layout
    # fc1 needs.  Pad/wrap lanes hit zero rows of the block-diag weight.
    xs_even = jnp.concatenate([x_odd_prev, x_even, x_odd], axis=1).astype(jnp.bfloat16)
    xs_odd = jnp.concatenate([x_even, x_odd, x_even_next], axis=1).astype(jnp.bfloat16)
    wconv = wconv_ref[...]
    conv_even = jnp.dot(xs_even, wconv, preferred_element_type=jnp.float32)
    conv_odd = jnp.dot(xs_odd, wconv, preferred_element_type=jnp.float32)

    # MaxPool1d(2,2) + bias + ReLU epilogue (only remaining VPU work).  Pad
    # lanes of each slab come out as ReLU(bias); the matching w1p rows are 0.
    pooled = jnp.maximum(jnp.maximum(conv_even, conv_odd) + convb_slab_ref[...], 0.0)

    h = jnp.dot(pooled.astype(jnp.bfloat16), w1p_ref[...],
                preferred_element_type=jnp.float32)
    h = jnp.maximum(h + b1_ref[...], 0.0)
    out = jnp.dot(h.astype(jnp.bfloat16), w2t_ref[...],
                  preferred_element_type=jnp.float32) + b2_ref[...]
    out_ref[...] = out.astype(out_ref.dtype)


def prepare_params(params):
    """One-time weight repacking (hoisted out of the per-call forward)."""
    convw, convb, w1, b1, w2, b2 = params
    convw = convw.astype(jnp.float32)
    convb = convb.astype(jnp.float32)

    # fc1 weight regrouped per conv channel, each 100-row slab zero-padded to
    # 128 rows matching the lane-padded slab layout:
    #   w1p[c*128 + p, o] = w1[o, c*100 + p]  for p < 100, else 0.
    w1r = w1.reshape(H1, N_CH, POOL).transpose(1, 2, 0)             # (16, 100, 64)
    w1p = jnp.pad(w1r, ((0, 0), (0, PAD_POOL - POOL), (0, 0)))      # (16, 128, 64)
    w1p = w1p.reshape(K_FUSED, H1).astype(jnp.bfloat16)             # (2048, 64)

    # fc2 weight/bias padded to 128 output lanes (lane-dense output stores).
    w2t_pad = jnp.pad(w2.T, ((0, 0), (0, OUT_PAD - OUT))).astype(jnp.bfloat16)
    b2_pad = jnp.pad(b2, (0, OUT_PAD - OUT)).reshape(1, OUT_PAD).astype(jnp.float32)

    # Block-diagonal conv weight for the MXU path:
    #   wconv_bd[k*128 + p, c*128 + p] = convw[c, k]  for p < 100, else 0.
    lane_ok = (jnp.arange(PAD_POOL) < POOL).astype(jnp.float32)
    eye = jnp.eye(PAD_POOL, dtype=jnp.float32) * lane_ok[:, None]
    wconv_bd = jnp.einsum("ck,pq->kpcq", convw, eye)
    wconv_bd = wconv_bd.reshape(K_CONV, K_FUSED).astype(jnp.bfloat16)

    # Per-slab conv bias (lane c*128+p -> convb[c]) for the MXU epilogue.
    convb_slab = jnp.repeat(convb, PAD_POOL).reshape(1, K_FUSED)

    return (convw.reshape(-1),                      # (48,)   f32, SMEM (VPU path)
            convb,                                  # (16,)   f32, SMEM (VPU path)
            convb_slab,                             # (1, 2048) f32  (MXU path)
            wconv_bd,                               # (384, 2048) bf16 (MXU path)
            w1p,                                    # (2048, 64) bf16
            b1.reshape(1, H1).astype(jnp.float32),  # (1, 64)  f32
            w2t_pad,                                # (64, 128) bf16
            b2_pad)                                 # (1, 128) f32


def _choose_tile(B):
    """Pick tile_b to minimise batch padding; keep >=MIN_GRID_STEPS steps."""
    b8 = _round_up(max(B, 1), 8)
    n_steps = pl.cdiv(b8, MAX_TILE_B)
    if MIN_GRID_STEPS > 1 and b8 >= 8 * MIN_GRID_STEPS:
        n_steps = max(n_steps, MIN_GRID_STEPS)
    tile_b = _round_up(pl.cdiv(b8, n_steps), 8)
    b_pad = _round_up(b8, tile_b)
    return tile_b, b_pad


def _cost_estimate(b_pad):
    flops = 2 * b_pad * (K_FUSED * H1 + H1 * OUT_PAD)         # fc1 + fc2
    if USE_MXU_CONV:
        flops += 2 * 2 * b_pad * K_CONV * K_FUSED             # conv matmuls
        flops += 4 * b_pad * K_FUSED                          # max/bias/relu
        w_bytes = (K_CONV * K_FUSED + K_FUSED * H1 + H1 * OUT_PAD) * 2 + K_FUSED * 4
    else:
        flops += 13 * b_pad * N_CH * PAD_POOL                 # VPU conv
        w_bytes = (K_FUSED * H1 + H1 * OUT_PAD) * 2 + N_CH * 4 * 4
    bytes_accessed = (2 * b_pad * PAD_POOL * 2                # bf16 even/odd in
                      + w_bytes + (H1 + OUT_PAD) * 4          # biases
                      + b_pad * OUT_PAD * 4)                  # f32 output
    return pl.CostEstimate(flops=flops, transcendentals=0,
                           bytes_accessed=bytes_accessed)


@jax.jit
def social_cnn_forward(social_info, prepared):
    (convw_flat, convb, convb_slab, wconv_bd, w1p, b1, w2t_pad, b2_pad) = prepared
    B, seq = social_info.shape
    assert seq == L

    # bf16 activations: halves the wrapper write + kernel input DMA.
    # TODO(synk): for very large B, produce the even/odd-split bf16 layout
    # upstream to avoid this extra strided-slice pass over the activations.
    x = social_info.astype(jnp.bfloat16)
    x_even = jnp.pad(x[:, 0::2], ((0, 0), (0, PAD_POOL - POOL)))    # (B, 128)
    x_odd = jnp.pad(x[:, 1::2], ((0, 0), (0, PAD_POOL - POOL)))     # (B, 128)

    tile_b, b_pad = _choose_tile(B)
    if b_pad != B:
        # Padded rows produce bias-driven junk outputs; they are sliced off
        # below and must never be reduced over before that slice.
        x_even = jnp.pad(x_even, ((0, b_pad - B), (0, 0)))
        x_odd = jnp.pad(x_odd, ((0, b_pad - B), (0, 0)))
    grid = (b_pad // tile_b,)

    x_spec = pl.BlockSpec((tile_b, PAD_POOL), lambda i: (i, 0))
    out_spec = pl.BlockSpec((tile_b, OUT_PAD), lambda i: (i, 0))
    w1p_spec = pl.BlockSpec((K_FUSED, H1), lambda i: (0, 0))
    b1_spec = pl.BlockSpec((1, H1), lambda i: (0, 0))
    w2_spec = pl.BlockSpec((H1, OUT_PAD), lambda i: (0, 0))
    b2_spec = pl.BlockSpec((1, OUT_PAD), lambda i: (0, 0))

    if USE_MXU_CONV:
        kernel = social_cnn_mxu_kernel
        extra_specs = [
            pl.BlockSpec((1, K_FUSED), lambda i: (0, 0)),           # convb slab
            pl.BlockSpec((K_CONV, K_FUSED), lambda i: (0, 0)),      # block-diag conv w
        ]
        extra_args = (convb_slab, wconv_bd)
        scratch_shapes = []
    else:
        kernel = social_cnn_vpu_kernel
        extra_specs = [
            pl.BlockSpec(memory_space=pltpu.MemorySpace.SMEM),      # convw (48,)
            pl.BlockSpec(memory_space=pltpu.MemorySpace.SMEM),      # convb (16,)
        ]
        extra_args = (convw_flat, convb)
        scratch_shapes = [pltpu.VMEM((tile_b, K_FUSED), jnp.bfloat16)]

    out = pl.pallas_call(
        kernel,
        out_shape=jax.ShapeDtypeStruct((b_pad, OUT_PAD), jnp.float32),
        grid=grid,
        in_specs=[x_spec, x_spec] + extra_specs
                 + [w1p_spec, b1_spec, w2_spec, b2_spec],
        out_specs=out_spec,
        scratch_shapes=scratch_shapes,
        compiler_params=pltpu.CompilerParams(
            dimension_semantics=("parallel",),
            vmem_limit_bytes=48 * 1024 * 1024),
        cost_estimate=_cost_estimate(b_pad),
    )(x_even, x_odd, *extra_args, w1p, b1, w2t_pad, b2_pad)
    return out[:B, :OUT]


def reference_forward(social_info, params):
    """Pure-JAX reference mirroring the PyTorch forward exactly (f32)."""
    convw, convb, w1, b1, w2, b2 = params
    x = social_info.astype(jnp.float32)
    B = x.shape[0]
    xp = jnp.pad(x, ((0, 0), (1, 1)))                        # conv padding=1
    conv = (xp[:, None, :-2] * convw[None, :, 0:1]
            + xp[:, None, 1:-1] * convw[None, :, 1:2]
            + xp[:, None, 2:] * convw[None, :, 2:3]
            + convb[None, :, None])                          # (B, 16, 200)
    conv = jnp.maximum(conv, 0.0)
    pooled = conv.reshape(B, N_CH, POOL, 2).max(axis=-1)     # (B, 16, 100)
    flat = pooled.reshape(B, N_CH * POOL)                    # channel-major, like .view
    h = jnp.maximum(
        jnp.dot(flat, w1.T, precision=jax.lax.Precision.HIGHEST) + b1, 0.0)
    return jnp.dot(h, w2.T, precision=jax.lax.Precision.HIGHEST) + b2


def init_params(key):
    k = jax.random.split(key, 6)
    s_conv = 1.0 / (3.0 ** 0.5)                 # fan_in = in_ch(1) * k(3)
    convw = jax.random.uniform(k[0], (N_CH, 3), jnp.float32, -s_conv, s_conv)
    convb = jax.random.uniform(k[1], (N_CH,), jnp.float32, -s_conv, s_conv)
    s1 = 1.0 / ((N_CH * POOL) ** 0.5)
    w1 = jax.random.uniform(k[2], (H1, N_CH * POOL), jnp.float32, -s1, s1)
    b1 = jax.random.uniform(k[3], (H1,), jnp.float32, -s1, s1)
    s2 = 1.0 / (H1 ** 0.5)
    w2 = jax.random.uniform(k[4], (OUT, H1), jnp.float32, -s2, s2)
    b2 = jax.random.uniform(k[5], (OUT,), jnp.float32, -s2, s2)
    return (convw, convb, w1, b1, w2, b2)


if __name__ == "__main__":
    key = jax.random.PRNGKey(0)
    pkey, xkey = jax.random.split(key)
    params = init_params(pkey)
    prepared = prepare_params(params)     # one-time weight repack (bf16, padded)

    B = 4
    social_info = jax.random.normal(xkey, (B, L), jnp.float32)

    out = jax.block_until_ready(social_cnn_forward(social_info, prepared))
    ref = reference_forward(social_info, params)

    assert out.shape == (B, OUT)
    # bf16 activations/weights with f32 accumulation is a deliberate precision
    # trade vs. the f32 reference; tolerance reflects that.
    if not jnp.allclose(out, ref, atol=2e-2, rtol=2e-2):
        raise AssertionError("Pallas kernel output does not match reference")
    print("KERNEL_OK")
</pallas_src>

<mosaic_0001>
module attributes {stable_mosaic.version = 11 : i64} {
  func.func @social_cnn_vpu_kernel(%arg0: i32, %arg1: memref<8x128xbf16, #tpu.memory_space<vmem>>, %arg2: memref<8x128xbf16, #tpu.memory_space<vmem>>, %arg3: memref<48xf32, #tpu.memory_space<smem>>, %arg4: memref<16xf32, #tpu.memory_space<smem>>, %arg5: memref<2048x64xbf16, #tpu.memory_space<vmem>>, %arg6: memref<1x64xf32, #tpu.memory_space<vmem>>, %arg7: memref<64x128xbf16, #tpu.memory_space<vmem>>, %arg8: memref<1x128xf32, #tpu.memory_space<vmem>>, %arg9: memref<8x128xf32, #tpu.memory_space<vmem>>, %arg10: memref<8x2048xbf16, #tpu.memory_space<vmem>>) attributes {dimension_semantics = [#tpu.dimension_semantics<parallel>], iteration_bounds = array<i64: 1>, scalar_prefetch = 0 : i64, scratch_operands = 1 : i64, tpu.core_type = #tpu.core_type<tc>, window_params = [{transform_indices = @transform_0, window_bounds = array<i64: 8, 128>}, {transform_indices = @transform_1, window_bounds = array<i64: 8, 128>}, {transform_indices = @transform_2, window_bounds = array<i64: 48>}, {transform_indices = @transform_3, window_bounds = array<i64: 16>}, {pipeline_mode = #tpu.pipeline_mode<synchronous>, transform_indices = @transform_4, window_bounds = array<i64: 2048, 64>}, {pipeline_mode = #tpu.pipeline_mode<synchronous>, transform_indices = @transform_5, window_bounds = array<i64: 1, 64>}, {pipeline_mode = #tpu.pipeline_mode<synchronous>, transform_indices = @transform_6, window_bounds = array<i64: 64, 128>}, {pipeline_mode = #tpu.pipeline_mode<synchronous>, transform_indices = @transform_7, window_bounds = array<i64: 1, 128>}, {transform_indices = @transform_8, window_bounds = array<i64: 8, 128>}]} {
    %c0 = arith.constant 0 : index
    %c0_0 = arith.constant 0 : index
    %0 = vector.load %arg1[%c0, %c0_0] : memref<8x128xbf16, #tpu.memory_space<vmem>>, vector<8x128xbf16>
    %1 = arith.extf %0 : vector<8x128xbf16> to vector<8x128xf32>
    %c0_1 = arith.constant 0 : index
    %c0_2 = arith.constant 0 : index
    %2 = vector.load %arg2[%c0_1, %c0_2] : memref<8x128xbf16, #tpu.memory_space<vmem>>, vector<8x128xbf16>
    %3 = arith.extf %2 : vector<8x128xbf16> to vector<8x128xf32>
    %c1_i32 = arith.constant 1 : i32
    %4 = tpu.dynamic_rotate %3 by %c1_i32 dim 1 : vector<8x128xf32>, i32 -> vector<8x128xf32>
    %c127_i32 = arith.constant 127 : i32
    %5 = tpu.dynamic_rotate %1 by %c127_i32 dim 1 : vector<8x128xf32>, i32 -> vector<8x128xf32>
    %c0_3 = arith.constant 0 : index
    %6 = memref.load %arg3[%c0_3] : memref<48xf32, #tpu.memory_space<smem>>
    %c1 = arith.constant 1 : index
    %7 = memref.load %arg3[%c1] : memref<48xf32, #tpu.memory_space<smem>>
    %c2 = arith.constant 2 : index
    %8 = memref.load %arg3[%c2] : memref<48xf32, #tpu.memory_space<smem>>
    %c0_4 = arith.constant 0 : index
    %9 = memref.load %arg4[%c0_4] : memref<16xf32, #tpu.memory_space<smem>>
    %10 = vector.broadcast %6 : f32 to vector<8x128xf32>
    %11 = arith.mulf %10, %4 : vector<8x128xf32>
    %12 = vector.broadcast %7 : f32 to vector<8x128xf32>
    %13 = arith.mulf %12, %1 : vector<8x128xf32>
    %14 = arith.addf %11, %13 : vector<8x128xf32>
    %15 = vector.broadcast %8 : f32 to vector<8x128xf32>
    %16 = arith.mulf %15, %3 : vector<8x128xf32>
    %17 = arith.addf %14, %16 : vector<8x128xf32>
    %18 = vector.broadcast %6 : f32 to vector<8x128xf32>
    %19 = arith.mulf %18, %1 : vector<8x128xf32>
    %20 = vector.broadcast %7 : f32 to vector<8x128xf32>
    %21 = arith.mulf %20, %3 : vector<8x128xf32>
    %22 = arith.addf %19, %21 : vector<8x128xf32>
    %23 = vector.broadcast %8 : f32 to vector<8x128xf32>
    %24 = arith.mulf %23, %5 : vector<8x128xf32>
    %25 = arith.addf %22, %24 : vector<8x128xf32>
    %26 = arith.maximumf %17, %25 : vector<8x128xf32>
    %27 = vector.broadcast %9 : f32 to vector<8x128xf32>
    %28 = arith.addf %26, %27 : vector<8x128xf32>
    %cst = arith.constant 0.000000e+00 : f32
    %29 = vector.broadcast %cst : f32 to vector<8x128xf32>
    %30 = arith.maximumf %28, %29 : vector<8x128xf32>
    %31 = arith.truncf %30 : vector<8x128xf32> to vector<8x128xbf16>
    %c0_5 = arith.constant 0 : index
    %c0_6 = arith.constant 0 : index
    %32 = vector.load %arg10[%c0_5, %c0_6] : memref<8x2048xbf16, #tpu.memory_space<vmem>>, vector<8x128xbf16>
    tpu.vector_store %arg10[%c0_5, %c0_6], %31 {strides = array<i32>} : memref<8x2048xbf16, #tpu.memory_space<vmem>>, vector<8x128xbf16>,
    %c3 = arith.constant 3 : index
    %33 = memref.load %arg3[%c3] : memref<48xf32, #tpu.memory_space<smem>>
    %c4 = arith.constant 4 : index
    %34 = memref.load %arg3[%c4] : memref<48xf32, #tpu.memory_space<smem>>
    %c5 = arith.constant 5 : index
    %35 = memref.load %arg3[%c5] : memref<48xf32, #tpu.memory_space<smem>>
    %c1_7 = arith.constant 1 : index
    %36 = memref.load %arg4[%c1_7] : memref<16xf32, #tpu.memory_space<smem>>
    %37 = vector.broadcast %33 : f32 to vector<8x128xf32>
    %38 = arith.mulf %37, %4 : vector<8x128xf32>
    %39 = vector.broadcast %34 : f32 to vector<8x128xf32>
    %40 = arith.mulf %39, %1 : vector<8x128xf32>
    %41 = arith.addf %38, %40 : vector<8x128xf32>
    %42 = vector.broadcast %35 : f32 to vector<8x128xf32>
    %43 = arith.mulf %42, %3 : vector<8x128xf32>
    %44 = arith.addf %41, %43 : vector<8x128xf32>
    %45 = vector.broadcast %33 : f32 to vector<8x128xf32>
    %46 = arith.mulf %45, %1 : vector<8x128xf32>
    %47 = vector.broadcast %34 : f32 to vector<8x128xf32>
    %48 = arith.mulf %47, %3 : vector<8x128xf32>
    %49 = arith.addf %46, %48 : vector<8x128xf32>
    %50 = vector.broadcast %35 : f32 to vector<8x128xf32>
    %51 = arith.mulf %50, %5 : vector<8x128xf32>
    %52 = arith.addf %49, %51 : vector<8x128xf32>
    %53 = arith.maximumf %44, %52 : vector<8x128xf32>
    %54 = vector.broadcast %36 : f32 to vector<8x128xf32>
    %55 = arith.addf %53, %54 : vector<8x128xf32>
    %cst_8 = arith.constant 0.000000e+00 : f32
    %56 = vector.broadcast %cst_8 : f32 to vector<8x128xf32>
    %57 = arith.maximumf %55, %56 : vector<8x128xf32>
    %58 = arith.truncf %57 : vector<8x128xf32> to vector<8x128xbf16>
    %c0_9 = arith.constant 0 : index
    %c128 = arith.constant 128 : index
    %59 = vector.load %arg10[%c0_9, %c128] : memref<8x2048xbf16, #tpu.memory_space<vmem>>, vector<8x128xbf16>
    tpu.vector_store %arg10[%c0_9, %c128], %58 {strides = array<i32>} : memref<8x2048xbf16, #tpu.memory_space<vmem>>, vector<8x128xbf16>,
    %c6 = arith.constant 6 : index
    %60 = memref.load %arg3[%c6] : memref<48xf32, #tpu.memory_space<smem>>
    %c7 = arith.constant 7 : index
    %61 = memref.load %arg3[%c7] : memref<48xf32, #tpu.memory_space<smem>>
    %c8 = arith.constant 8 : index
    %62 = memref.load %arg3[%c8] : memref<48xf32, #tpu.memory_space<smem>>
    %c2_10 = arith.constant 2 : index
    %63 = memref.load %arg4[%c2_10] : memref<16xf32, #tpu.memory_space<smem>>
    %64 = vector.broadcast %60 : f32 to vector<8x128xf32>
    %65 = arith.mulf %64, %4 : vector<8x128xf32>
    %66 = vector.broadcast %61 : f32 to vector<8x128xf32>
    %67 = arith.mulf %66, %1 : vector<8x128xf32>
    %68 = arith.addf %65, %67 : vector<8x128xf32>
    %69 = vector.broadcast %62 : f32 to vector<8x128xf32>
    %70 = arith.mulf %69, %3 : vector<8x128xf32>
    %71 = arith.addf %68, %70 : vector<8x128xf32>
    %72 = vector.broadcast %60 : f32 to vector<8x128xf32>
    %73 = arith.mulf %72, %1 : vector<8x128xf32>
    %74 = vector.broadcast %61 : f32 to vector<8x128xf32>
    %75 = arith.mulf %74, %3 : vector<8x128xf32>
    %76 = arith.addf %73, %75 : vector<8x128xf32>
    %77 = vector.broadcast %62 : f32 to vector<8x128xf32>
    %78 = arith.mulf %77, %5 : vector<8x128xf32>
    %79 = arith.addf %76, %78 : vector<8x128xf32>
    %80 = arith.maximumf %71, %79 : vector<8x128xf32>
    %81 = vector.broadcast %63 : f32 to vector<8x128xf32>
    %82 = arith.addf %80, %81 : vector<8x128xf32>
    %cst_11 = arith.constant 0.000000e+00 : f32
    %83 = vector.broadcast %cst_11 : f32 to vector<8x128xf32>
    %84 = arith.maximumf %82, %83 : vector<8x128xf32>
    %85 = arith.truncf %84 : vector<8x128xf32> to vector<8x128xbf16>
    %c0_12 = arith.constant 0 : index
    %c256 = arith.constant 256 : index
    %86 = vector.load %arg10[%c0_12, %c256] : memref<8x2048xbf16, #tpu.memory_space<vmem>>, vector<8x128xbf16>
    tpu.vector_store %arg10[%c0_12, %c256], %85 {strides = array<i32>} : memref<8x2048xbf16, #tpu.memory_space<vmem>>, vector<8x128xbf16>,
    %c9 = arith.constant 9 : index
    %87 = memref.load %arg3[%c9] : memref<48xf32, #tpu.memory_space<smem>>
    %c10 = arith.constant 10 : index
    %88 = memref.load %arg3[%c10] : memref<48xf32, #tpu.memory_space<smem>>
    %c11 = arith.constant 11 : index
    %89 = memref.load %arg3[%c11] : memref<48xf32, #tpu.memory_space<smem>>
    %c3_13 = arith.constant 3 : index
    %90 = memref.load %arg4[%c3_13] : memref<16xf32, #tpu.memory_space<smem>>
    %91 = vector.broadcast %87 : f32 to vector<8x128xf32>
    %92 = arith.mulf %91, %4 : vector<8x128xf32>
    %93 = vector.broadcast %88 : f32 to vector<8x128xf32>
    %94 = arith.mulf %93, %1 : vector<8x128xf32>
    %95 = arith.addf %92, %94 : vector<8x128xf32>
    %96 = vector.broadcast %89 : f32 to vector<8x128xf32>
    %97 = arith.mulf %96, %3 : vector<8x128xf32>
    %98 = arith.addf %95, %97 : vector<8x128xf32>
    %99 = vector.broadcast %87 : f32 to vector<8x128xf32>
    %100 = arith.mulf %99, %1 : vector<8x128xf32>
    %101 = vector.broadcast %88 : f32 to vector<8x128xf32>
    %102 = arith.mulf %101, %3 : vector<8x128xf32>
    %103 = arith.addf %100, %102 : vector<8x128xf32>
    %104 = vector.broadcast %89 : f32 to vector<8x128xf32>
    %105 = arith.mulf %104, %5 : vector<8x128xf32>
    %106 = arith.addf %103, %105 : vector<8x128xf32>
    %107 = arith.maximumf %98, %106 : vector<8x128xf32>
    %108 = vector.broadcast %90 : f32 to vector<8x128xf32>
    %109 = arith.addf %107, %108 : vector<8x128xf32>
    %cst_14 = arith.constant 0.000000e+00 : f32
    %110 = vector.broadcast %cst_14 : f32 to vector<8x128xf32>
    %111 = arith.maximumf %109, %110 : vector<8x128xf32>
    %112 = arith.truncf %111 : vector<8x128xf32> to vector<8x128xbf16>
    %c0_15 = arith.constant 0 : index
    %c384 = arith.constant 384 : index
    %113 = vector.load %arg10[%c0_15, %c384] : memref<8x2048xbf16, #tpu.memory_space<vmem>>, vector<8x128xbf16>
    tpu.vector_store %arg10[%c0_15, %c384], %112 {strides = array<i32>} : memref<8x2048xbf16, #tpu.memory_space<vmem>>, vector<8x128xbf16>,
    %c12 = arith.constant 12 : index
    %114 = memref.load %arg3[%c12] : memref<48xf32, #tpu.memory_space<smem>>
    %c13 = arith.constant 13 : index
    %115 = memref.load %arg3[%c13] : memref<48xf32, #tpu.memory_space<smem>>
    %c14 = arith.constant 14 : index
    %116 = memref.load %arg3[%c14] : memref<48xf32, #tpu.memory_space<smem>>
    %c4_16 = arith.constant 4 : index
    %117 = memref.load %arg4[%c4_16] : memref<16xf32, #tpu.memory_space<smem>>
    %118 = vector.broadcast %114 : f32 to vector<8x128xf32>
    %119 = arith.mulf %118, %4 : vector<8x128xf32>
    %120 = vector.broadcast %115 : f32 to vector<8x128xf32>
    %121 = arith.mulf %120, %1 : vector<8x128xf32>
    %122 = arith.addf %119, %121 : vector<8x128xf32>
    %123 = vector.broadcast %116 : f32 to vector<8x128xf32>
    %124 = arith.mulf %123, %3 : vector<8x128xf32>
    %125 = arith.addf %122, %124 : vector<8x128xf32>
    %126 = vector.broadcast %114 : f32 to vector<8x128xf32>
    %127 = arith.mulf %126, %1 : vector<8x128xf32>
    %128 = vector.broadcast %115 : f32 to vector<8x128xf32>
    %129 = arith.mulf %128, %3 : vector<8x128xf32>
    %130 = arith.addf %127, %129 : vector<8x128xf32>
    %131 = vector.broadcast %116 : f32 to vector<8x128xf32>
    %132 = arith.mulf %131, %5 : vector<8x128xf32>
    %133 = arith.addf %130, %132 : vector<8x128xf32>
    %134 = arith.maximumf %125, %133 : vector<8x128xf32>
    %135 = vector.broadcast %117 : f32 to vector<8x128xf32>
    %136 = arith.addf %134, %135 : vector<8x128xf32>
    %cst_17 = arith.constant 0.000000e+00 : f32
    %137 = vector.broadcast %cst_17 : f32 to vector<8x128xf32>
    %138 = arith.maximumf %136, %137 : vector<8x128xf32>
    %139 = arith.truncf %138 : vector<8x128xf32> to vector<8x128xbf16>
    %c0_18 = arith.constant 0 : index
    %c512 = arith.constant 512 : index
    %140 = vector.load %arg10[%c0_18, %c512] : memref<8x2048xbf16, #tpu.memory_space<vmem>>, vector<8x128xbf16>
    tpu.vector_store %arg10[%c0_18, %c512], %139 {strides = array<i32>} : memref<8x2048xbf16, #tpu.memory_space<vmem>>, vector<8x128xbf16>,
    %c15 = arith.constant 15 : index
    %141 = memref.load %arg3[%c15] : memref<48xf32, #tpu.memory_space<smem>>
    %c16 = arith.constant 16 : index
    %142 = memref.load %arg3[%c16] : memref<48xf32, #tpu.memory_space<smem>>
    %c17 = arith.constant 17 : index
    %143 = memref.load %arg3[%c17] : memref<48xf32, #tpu.memory_space<smem>>
    %c5_19 = arith.constant 5 : index
    %144 = memref.load %arg4[%c5_19] : memref<16xf32, #tpu.memory_space<smem>>
    %145 = vector.broadcast %141 : f32 to vector<8x128xf32>
    %146 = arith.mulf %145, %4 : vector<8x128xf32>
    %147 = vector.broadcast %142 : f32 to vector<8x128xf32>
    %148 = arith.mulf %147, %1 : vector<8x128xf32>
    %149 = arith.addf %146, %148 : vector<8x128xf32>
    %150 = vector.broadcast %143 : f32 to vector<8x128xf32>
    %151 = arith.mulf %150, %3 : vector<8x128xf32>
    %152 = arith.addf %149, %151 : vector<8x128xf32>
    %153 = vector.broadcast %141 : f32 to vector<8x128xf32>
    %154 = arith.mulf %153, %1 : vector<8x128xf32>
    %155 = vector.broadcast %142 : f32 to vector<8x128xf32>
    %156 = arith.mulf %155, %3 : vector<8x128xf32>
    %157 = arith.addf %154, %156 : vector<8x128xf32>
    %158 = vector.broadcast %143 : f32 to vector<8x128xf32>
    %159 = arith.mulf %158, %5 : vector<8x128xf32>
    %160 = arith.addf %157, %159 : vector<8x128xf32>
    %161 = arith.maximumf %152, %160 : vector<8x128xf32>
    %162 = vector.broadcast %144 : f32 to vector<8x128xf32>
    %163 = arith.addf %161, %162 : vector<8x128xf32>
    %cst_20 = arith.constant 0.000000e+00 : f32
    %164 = vector.broadcast %cst_20 : f32 to vector<8x128xf32>
    %165 = arith.maximumf %163, %164 : vector<8x128xf32>
    %166 = arith.truncf %165 : vector<8x128xf32> to vector<8x128xbf16>
    %c0_21 = arith.constant 0 : index
    %c640 = arith.constant 640 : index
    %167 = vector.load %arg10[%c0_21, %c640] : memref<8x2048xbf16, #tpu.memory_space<vmem>>, vector<8x128xbf16>
    tpu.vector_store %arg10[%c0_21, %c640], %166 {strides = array<i32>} : memref<8x2048xbf16, #tpu.memory_space<vmem>>, vector<8x128xbf16>,
    %c18 = arith.constant 18 : index
    %168 = memref.load %arg3[%c18] : memref<48xf32, #tpu.memory_space<smem>>
    %c19 = arith.constant 19 : index
    %169 = memref.load %arg3[%c19] : memref<48xf32, #tpu.memory_space<smem>>
    %c20 = arith.constant 20 : index
    %170 = memref.load %arg3[%c20] : memref<48xf32, #tpu.memory_space<smem>>
    %c6_22 = arith.constant 6 : index
    %171 = memref.load %arg4[%c6_22] : memref<16xf32, #tpu.memory_space<smem>>
    %172 = vector.broadcast %168 : f32 to vector<8x128xf32>
    %173 = arith.mulf %172, %4 : vector<8x128xf32>
    %174 = vector.broadcast %169 : f32 to vector<8x128xf32>
    %175 = arith.mulf %174, %1 : vector<8x128xf32>
    %176 = arith.addf %173, %175 : vector<8x128xf32>
    %177 = vector.broadcast %170 : f32 to vector<8x128xf32>
    %178 = arith.mulf %177, %3 : vector<8x128xf32>
    %179 = arith.addf %176, %178 : vector<8x128xf32>
    %180 = vector.broadcast %168 : f32 to vector<8x128xf32>
    %181 = arith.mulf %180, %1 : vector<8x128xf32>
    %182 = vector.broadcast %169 : f32 to vector<8x128xf32>
    %183 = arith.mulf %182, %3 : vector<8x128xf32>
    %184 = arith.addf %181, %183 : vector<8x128xf32>
    %185 = vector.broadcast %170 : f32 to vector<8x128xf32>
    %186 = arith.mulf %185, %5 : vector<8x128xf32>
    %187 = arith.addf %184, %186 : vector<8x128xf32>
    %188 = arith.maximumf %179, %187 : vector<8x128xf32>
    %189 = vector.broadcast %171 : f32 to vector<8x128xf32>
    %190 = arith.addf %188, %189 : vector<8x128xf32>
    %cst_23 = arith.constant 0.000000e+00 : f32
    %191 = vector.broadcast %cst_23 : f32 to vector<8x128xf32>
    %192 = arith.maximumf %190, %191 : vector<8x128xf32>
    %193 = arith.truncf %192 : vector<8x128xf32> to vector<8x128xbf16>
    %c0_24 = arith.constant 0 : index
    %c768 = arith.constant 768 : index
    %194 = vector.load %arg10[%c0_24, %c768] : memref<8x2048xbf16, #tpu.memory_space<vmem>>, vector<8x128xbf16>
    tpu.vector_store %arg10[%c0_24, %c768], %193 {strides = array<i32>} : memref<8x2048xbf16, #tpu.memory_space<vmem>>, vector<8x128xbf16>,
    %c21 = arith.constant 21 : index
    %195 = memref.load %arg3[%c21] : memref<48xf32, #tpu.memory_space<smem>>
    %c22 = arith.constant 22 : index
    %196 = memref.load %arg3[%c22] : memref<48xf32, #tpu.memory_space<smem>>
    %c23 = arith.constant 23 : index
    %197 = memref.load %arg3[%c23] : memref<48xf32, #tpu.memory_space<smem>>
    %c7_25 = arith.constant 7 : index
    %198 = memref.load %arg4[%c7_25] : memref<16xf32, #tpu.memory_space<smem>>
    %199 = vector.broadcast %195 : f32 to vector<8x128xf32>
    %200 = arith.mulf %199, %4 : vector<8x128xf32>
    %201 = vector.broadcast %196 : f32 to vector<8x128xf32>
    %202 = arith.mulf %201, %1 : vector<8x128xf32>
    %203 = arith.addf %200, %202 : vector<8x128xf32>
    %204 = vector.broadcast %197 : f32 to vector<8x128xf32>
    %205 = arith.mulf %204, %3 : vector<8x128xf32>
    %206 = arith.addf %203, %205 : vector<8x128xf32>
    %207 = vector.broadcast %195 : f32 to vector<8x128xf32>
    %208 = arith.mulf %207, %1 : vector<8x128xf32>
    %209 = vector.broadcast %196 : f32 to vector<8x128xf32>
    %210 = arith.mulf %209, %3 : vector<8x128xf32>
    %211 = arith.addf %208, %210 : vector<8x128xf32>
    %212 = vector.broadcast %197 : f32 to vector<8x128xf32>
    %213 = arith.mulf %212, %5 : vector<8x128xf32>
    %214 = arith.addf %211, %213 : vector<8x128xf32>
    %215 = arith.maximumf %206, %214 : vector<8x128xf32>
    %216 = vector.broadcast %198 : f32 to vector<8x128xf32>
    %217 = arith.addf %215, %216 : vector<8x128xf32>
    %cst_26 = arith.constant 0.000000e+00 : f32
    %218 = vector.broadcast %cst_26 : f32 to vector<8x128xf32>
    %219 = arith.maximumf %217, %218 : vector<8x128xf32>
    %220 = arith.truncf %219 : vector<8x128xf32> to vector<8x128xbf16>
    %c0_27 = arith.constant 0 : index
    %c896 = arith.constant 896 : index
    %221 = vector.load %arg10[%c0_27, %c896] : memref<8x2048xbf16, #tpu.memory_space<vmem>>, vector<8x128xbf16>
    tpu.vector_store %arg10[%c0_27, %c896], %220 {strides = array<i32>} : memref<8x2048xbf16, #tpu.memory_space<vmem>>, vector<8x128xbf16>,
    %c24 = arith.constant 24 : index
    %222 = memref.load %arg3[%c24] : memref<48xf32, #tpu.memory_space<smem>>
    %c25 = arith.constant 25 : index
    %223 = memref.load %arg3[%c25] : memref<48xf32, #tpu.memory_space<smem>>
    %c26 = arith.constant 26 : index
    %224 = memref.load %arg3[%c26] : memref<48xf32, #tpu.memory_space<smem>>
    %c8_28 = arith.constant 8 : index
    %225 = memref.load %arg4[%c8_28] : memref<16xf32, #tpu.memory_space<smem>>
    %226 = vector.broadcast %222 : f32 to vector<8x128xf32>
    %227 = arith.mulf %226, %4 : vector<8x128xf32>
    %228 = vector.broadcast %223 : f32 to vector<8x128xf32>
    %229 = arith.mulf %228, %1 : vector<8x128xf32>
    %230 = arith.addf %227, %229 : vector<8x128xf32>
    %231 = vector.broadcast %224 : f32 to vector<8x128xf32>
    %232 = arith.mulf %231, %3 : vector<8x128xf32>
    %233 = arith.addf %230, %232 : vector<8x128xf32>
    %234 = vector.broadcast %222 : f32 to vector<8x128xf32>
    %235 = arith.mulf %234, %1 : vector<8x128xf32>
    %236 = vector.broadcast %223 : f32 to vector<8x128xf32>
    %237 = arith.mulf %236, %3 : vector<8x128xf32>
    %238 = arith.addf %235, %237 : vector<8x128xf32>
    %239 = vector.broadcast %224 : f32 to vector<8x128xf32>
    %240 = arith.mulf %239, %5 : vector<8x128xf32>
    %241 = arith.addf %238, %240 : vector<8x128xf32>
    %242 = arith.maximumf %233, %241 : vector<8x128xf32>
    %243 = vector.broadcast %225 : f32 to vector<8x128xf32>
    %244 = arith.addf %242, %243 : vector<8x128xf32>
    %cst_29 = arith.constant 0.000000e+00 : f32
    %245 = vector.broadcast %cst_29 : f32 to vector<8x128xf32>
    %246 = arith.maximumf %244, %245 : vector<8x128xf32>
    %247 = arith.truncf %246 : vector<8x128xf32> to vector<8x128xbf16>
    %c0_30 = arith.constant 0 : index
    %c1024 = arith.constant 1024 : index
    %248 = vector.load %arg10[%c0_30, %c1024] : memref<8x2048xbf16, #tpu.memory_space<vmem>>, vector<8x128xbf16>
    tpu.vector_store %arg10[%c0_30, %c1024], %247 {strides = array<i32>} : memref<8x2048xbf16, #tpu.memory_space<vmem>>, vector<8x128xbf16>,
    %c27 = arith.constant 27 : index
    %249 = memref.load %arg3[%c27] : memref<48xf32, #tpu.memory_space<smem>>
    %c28 = arith.constant 28 : index
    %250 = memref.load %arg3[%c28] : memref<48xf32, #tpu.memory_space<smem>>
    %c29 = arith.constant 29 : index
    %251 = memref.load %arg3[%c29] : memref<48xf32, #tpu.memory_space<smem>>
    %c9_31 = arith.constant 9 : index
    %252 = memref.load %arg4[%c9_31] : memref<16xf32, #tpu.memory_space<smem>>
    %253 = vector.broadcast %249 : f32 to vector<8x128xf32>
    %254 = arith.mulf %253, %4 : vector<8x128xf32>
    %255 = vector.broadcast %250 : f32 to vector<8x128xf32>
    %256 = arith.mulf %255, %1 : vector<8x128xf32>
    %257 = arith.addf %254, %256 : vector<8x128xf32>
    %258 = vector.broadcast %251 : f32 to vector<8x128xf32>
    %259 = arith.mulf %258, %3 : vector<8x128xf32>
    %260 = arith.addf %257, %259 : vector<8x128xf32>
    %261 = vector.broadcast %249 : f32 to vector<8x128xf32>
    %262 = arith.mulf %261, %1 : vector<8x128xf32>
    %263 = vector.broadcast %250 : f32 to vector<8x128xf32>
    %264 = arith.mulf %263, %3 : vector<8x128xf32>
    %265 = arith.addf %262, %264 : vector<8x128xf32>
    %266 = vector.broadcast %251 : f32 to vector<8x128xf32>
    %267 = arith.mulf %266, %5 : vector<8x128xf32>
    %268 = arith.addf %265, %267 : vector<8x128xf32>
    %269 = arith.maximumf %260, %268 : vector<8x128xf32>
    %270 = vector.broadcast %252 : f32 to vector<8x128xf32>
    %271 = arith.addf %269, %270 : vector<8x128xf32>
    %cst_32 = arith.constant 0.000000e+00 : f32
    %272 = vector.broadcast %cst_32 : f32 to vector<8x128xf32>
    %273 = arith.maximumf %271, %272 : vector<8x128xf32>
    %274 = arith.truncf %273 : vector<8x128xf32> to vector<8x128xbf16>
    %c0_33 = arith.constant 0 : index
    %c1152 = arith.constant 1152 : index
    %275 = vector.load %arg10[%c0_33, %c1152] : memref<8x2048xbf16, #tpu.memory_space<vmem>>, vector<8x128xbf16>
    tpu.vector_store %arg10[%c0_33, %c1152], %274 {strides = array<i32>} : memref<8x2048xbf16, #tpu.memory_space<vmem>>, vector<8x128xbf16>,
    %c30 = arith.constant 30 : index
    %276 = memref.load %arg3[%c30] : memref<48xf32, #tpu.memory_space<smem>>
    %c31 = arith.constant 31 : index
    %277 = memref.load %arg3[%c31] : memref<48xf32, #tpu.memory_space<smem>>
    %c32 = arith.constant 32 : index
    %278 = memref.load %arg3[%c32] : memref<48xf32, #tpu.memory_space<smem>>
    %c10_34 = arith.constant 10 : index
    %279 = memref.load %arg4[%c10_34] : memref<16xf32, #tpu.memory_space<smem>>
    %280 = vector.broadcast %276 : f32 to vector<8x128xf32>
    %281 = arith.mulf %280, %4 : vector<8x128xf32>
    %282 = vector.broadcast %277 : f32 to vector<8x128xf32>
    %283 = arith.mulf %282, %1 : vector<8x128xf32>
    %284 = arith.addf %281, %283 : vector<8x128xf32>
    %285 = vector.broadcast %278 : f32 to vector<8x128xf32>
    %286 = arith.mulf %285, %3 : vector<8x128xf32>
    %287 = arith.addf %284, %286 : vector<8x128xf32>
    %288 = vector.broadcast %276 : f32 to vector<8x128xf32>
    %289 = arith.mulf %288, %1 : vector<8x128xf32>
    %290 = vector.broadcast %277 : f32 to vector<8x128xf32>
    %291 = arith.mulf %290, %3 : vector<8x128xf32>
    %292 = arith.addf %289, %291 : vector<8x128xf32>
    %293 = vector.broadcast %278 : f32 to vector<8x128xf32>
    %294 = arith.mulf %293, %5 : vector<8x128xf32>
    %295 = arith.addf %292, %294 : vector<8x128xf32>
    %296 = arith.maximumf %287, %295 : vector<8x128xf32>
    %297 = vector.broadcast %279 : f32 to vector<8x128xf32>
    %298 = arith.addf %296, %297 : vector<8x128xf32>
    %cst_35 = arith.constant 0.000000e+00 : f32
    %299 = vector.broadcast %cst_35 : f32 to vector<8x128xf32>
    %300 = arith.maximumf %298, %299 : vector<8x128xf32>
    %301 = arith.truncf %300 : vector<8x128xf32> to vector<8x128xbf16>
    %c0_36 = arith.constant 0 : index
    %c1280 = arith.constant 1280 : index
    %302 = vector.load %arg10[%c0_36, %c1280] : memref<8x2048xbf16, #tpu.memory_space<vmem>>, vector<8x128xbf16>
    tpu.vector_store %arg10[%c0_36, %c1280], %301 {strides = array<i32>} : memref<8x2048xbf16, #tpu.memory_space<vmem>>, vector<8x128xbf16>,
    %c33 = arith.constant 33 : index
    %303 = memref.load %arg3[%c33] : memref<48xf32, #tpu.memory_space<smem>>
    %c34 = arith.constant 34 : index
    %304 = memref.load %arg3[%c34] : memref<48xf32, #tpu.memory_space<smem>>
    %c35 = arith.constant 35 : index
    %305 = memref.load %arg3[%c35] : memref<48xf32, #tpu.memory_space<smem>>
    %c11_37 = arith.constant 11 : index
    %306 = memref.load %arg4[%c11_37] : memref<16xf32, #tpu.memory_space<smem>>
    %307 = vector.broadcast %303 : f32 to vector<8x128xf32>
    %308 = arith.mulf %307, %4 : vector<8x128xf32>
    %309 = vector.broadcast %304 : f32 to vector<8x128xf32>
    %310 = arith.mulf %309, %1 : vector<8x128xf32>
    %311 = arith.addf %308, %310 : vector<8x128xf32>
    %312 = vector.broadcast %305 : f32 to vector<8x128xf32>
    %313 = arith.mulf %312, %3 : vector<8x128xf32>
    %314 = arith.addf %311, %313 : vector<8x128xf32>
    %315 = vector.broadcast %303 : f32 to vector<8x128xf32>
    %316 = arith.mulf %315, %1 : vector<8x128xf32>
    %317 = vector.broadcast %304 : f32 to vector<8x128xf32>
    %318 = arith.mulf %317, %3 : vector<8x128xf32>
    %319 = arith.addf %316, %318 : vector<8x128xf32>
    %320 = vector.broadcast %305 : f32 to vector<8x128xf32>
    %321 = arith.mulf %320, %5 : vector<8x128xf32>
    %322 = arith.addf %319, %321 : vector<8x128xf32>
    %323 = arith.maximumf %314, %322 : vector<8x128xf32>
    %324 = vector.broadcast %306 : f32 to vector<8x128xf32>
    %325 = arith.addf %323, %324 : vector<8x128xf32>
    %cst_38 = arith.constant 0.000000e+00 : f32
    %326 = vector.broadcast %cst_38 : f32 to vector<8x128xf32>
    %327 = arith.maximumf %325, %326 : vector<8x128xf32>
    %328 = arith.truncf %327 : vector<8x128xf32> to vector<8x128xbf16>
    %c0_39 = arith.constant 0 : index
    %c1408 = arith.constant 1408 : index
    %329 = vector.load %arg10[%c0_39, %c1408] : memref<8x2048xbf16, #tpu.memory_space<vmem>>, vector<8x128xbf16>
    tpu.vector_store %arg10[%c0_39, %c1408], %328 {strides = array<i32>} : memref<8x2048xbf16, #tpu.memory_space<vmem>>, vector<8x128xbf16>,
    %c36 = arith.constant 36 : index
    %330 = memref.load %arg3[%c36] : memref<48xf32, #tpu.memory_space<smem>>
    %c37 = arith.constant 37 : index
    %331 = memref.load %arg3[%c37] : memref<48xf32, #tpu.memory_space<smem>>
    %c38 = arith.constant 38 : index
    %332 = memref.load %arg3[%c38] : memref<48xf32, #tpu.memory_space<smem>>
    %c12_40 = arith.constant 12 : index
    %333 = memref.load %arg4[%c12_40] : memref<16xf32, #tpu.memory_space<smem>>
    %334 = vector.broadcast %330 : f32 to vector<8x128xf32>
    %335 = arith.mulf %334, %4 : vector<8x128xf32>
    %336 = vector.broadcast %331 : f32 to vector<8x128xf32>
    %337 = arith.mulf %336, %1 : vector<8x128xf32>
    %338 = arith.addf %335, %337 : vector<8x128xf32>
    %339 = vector.broadcast %332 : f32 to vector<8x128xf32>
    %340 = arith.mulf %339, %3 : vector<8x128xf32>
    %341 = arith.addf %338, %340 : vector<8x128xf32>
    %342 = vector.broadcast %330 : f32 to vector<8x128xf32>
    %343 = arith.mulf %342, %1 : vector<8x128xf32>
    %344 = vector.broadcast %331 : f32 to vector<8x128xf32>
    %345 = arith.mulf %344, %3 : vector<8x128xf32>
    %346 = arith.addf %343, %345 : vector<8x128xf32>
    %347 = vector.broadcast %332 : f32 to vector<8x128xf32>
    %348 = arith.mulf %347, %5 : vector<8x128xf32>
    %349 = arith.addf %346, %348 : vector<8x128xf32>
    %350 = arith.maximumf %341, %349 : vector<8x128xf32>
    %351 = vector.broadcast %333 : f32 to vector<8x128xf32>
    %352 = arith.addf %350, %351 : vector<8x128xf32>
    %cst_41 = arith.constant 0.000000e+00 : f32
    %353 = vector.broadcast %cst_41 : f32 to vector<8x128xf32>
    %354 = arith.maximumf %352, %353 : vector<8x128xf32>
    %355 = arith.truncf %354 : vector<8x128xf32> to vector<8x128xbf16>
    %c0_42 = arith.constant 0 : index
    %c1536 = arith.constant 1536 : index
    %356 = vector.load %arg10[%c0_42, %c1536] : memref<8x2048xbf16, #tpu.memory_space<vmem>>, vector<8x128xbf16>
    tpu.vector_store %arg10[%c0_42, %c1536], %355 {strides = array<i32>} : memref<8x2048xbf16, #tpu.memory_space<vmem>>, vector<8x128xbf16>,
    %c39 = arith.constant 39 : index
    %357 = memref.load %arg3[%c39] : memref<48xf32, #tpu.memory_space<smem>>
    %c40 = arith.constant 40 : index
    %358 = memref.load %arg3[%c40] : memref<48xf32, #tpu.memory_space<smem>>
    %c41 = arith.constant 41 : index
    %359 = memref.load %arg3[%c41] : memref<48xf32, #tpu.memory_space<smem>>
    %c13_43 = arith.constant 13 : index
    %360 = memref.load %arg4[%c13_43] : memref<16xf32, #tpu.memory_space<smem>>
    %361 = vector.broadcast %357 : f32 to vector<8x128xf32>
    %362 = arith.mulf %361, %4 : vector<8x128xf32>
    %363 = vector.broadcast %358 : f32 to vector<8x128xf32>
    %364 = arith.mulf %363, %1 : vector<8x128xf32>
    %365 = arith.addf %362, %364 : vector<8x128xf32>
    %366 = vector.broadcast %359 : f32 to vector<8x128xf32>
    %367 = arith.mulf %366, %3 : vector<8x128xf32>
    %368 = arith.addf %365, %367 : vector<8x128xf32>
    %369 = vector.broadcast %357 : f32 to vector<8x128xf32>
    %370 = arith.mulf %369, %1 : vector<8x128xf32>
    %371 = vector.broadcast %358 : f32 to vector<8x128xf32>
    %372 = arith.mulf %371, %3 : vector<8x128xf32>
    %373 = arith.addf %370, %372 : vector<8x128xf32>
    %374 = vector.broadcast %359 : f32 to vector<8x128xf32>
    %375 = arith.mulf %374, %5 : vector<8x128xf32>
    %376 = arith.addf %373, %375 : vector<8x128xf32>
    %377 = arith.maximumf %368, %376 : vector<8x128xf32>
    %378 = vector.broadcast %360 : f32 to vector<8x128xf32>
    %379 = arith.addf %377, %378 : vector<8x128xf32>
    %cst_44 = arith.constant 0.000000e+00 : f32
    %380 = vector.broadcast %cst_44 : f32 to vector<8x128xf32>
    %381 = arith.maximumf %379, %380 : vector<8x128xf32>
    %382 = arith.truncf %381 : vector<8x128xf32> to vector<8x128xbf16>
    %c0_45 = arith.constant 0 : index
    %c1664 = arith.constant 1664 : index
    %383 = vector.load %arg10[%c0_45, %c1664] : memref<8x2048xbf16, #tpu.memory_space<vmem>>, vector<8x128xbf16>
    tpu.vector_store %arg10[%c0_45, %c1664], %382 {strides = array<i32>} : memref<8x2048xbf16, #tpu.memory_space<vmem>>, vector<8x128xbf16>,
    %c42 = arith.constant 42 : index
    %384 = memref.load %arg3[%c42] : memref<48xf32, #tpu.memory_space<smem>>
    %c43 = arith.constant 43 : index
    %385 = memref.load %arg3[%c43] : memref<48xf32, #tpu.memory_space<smem>>
    %c44 = arith.constant 44 : index
    %386 = memref.load %arg3[%c44] : memref<48xf32, #tpu.memory_space<smem>>
    %c14_46 = arith.constant 14 : index
    %387 = memref.load %arg4[%c14_46] : memref<16xf32, #tpu.memory_space<smem>>
    %388 = vector.broadcast %384 : f32 to vector<8x128xf32>
    %389 = arith.mulf %388, %4 : vector<8x128xf32>
    %390 = vector.broadcast %385 : f32 to vector<8x128xf32>
    %391 = arith.mulf %390, %1 : vector<8x128xf32>
    %392 = arith.addf %389, %391 : vector<8x128xf32>
    %393 = vector.broadcast %386 : f32 to vector<8x128xf32>
    %394 = arith.mulf %393, %3 : vector<8x128xf32>
    %395 = arith.addf %392, %394 : vector<8x128xf32>
    %396 = vector.broadcast %384 : f32 to vector<8x128xf32>
    %397 = arith.mulf %396, %1 : vector<8x128xf32>
    %398 = vector.broadcast %385 : f32 to vector<8x128xf32>
    %399 = arith.mulf %398, %3 : vector<8x128xf32>
    %400 = arith.addf %397, %399 : vector<8x128xf32>
    %401 = vector.broadcast %386 : f32 to vector<8x128xf32>
    %402 = arith.mulf %401, %5 : vector<8x128xf32>
    %403 = arith.addf %400, %402 : vector<8x128xf32>
    %404 = arith.maximumf %395, %403 : vector<8x128xf32>
    %405 = vector.broadcast %387 : f32 to vector<8x128xf32>
    %406 = arith.addf %404, %405 : vector<8x128xf32>
    %cst_47 = arith.constant 0.000000e+00 : f32
    %407 = vector.broadcast %cst_47 : f32 to vector<8x128xf32>
    %408 = arith.maximumf %406, %407 : vector<8x128xf32>
    %409 = arith.truncf %408 : vector<8x128xf32> to vector<8x128xbf16>
    %c0_48 = arith.constant 0 : index
    %c1792 = arith.constant 1792 : index
    %410 = vector.load %arg10[%c0_48, %c1792] : memref<8x2048xbf16, #tpu.memory_space<vmem>>, vector<8x128xbf16>
    tpu.vector_store %arg10[%c0_48, %c1792], %409 {strides = array<i32>} : memref<8x2048xbf16, #tpu.memory_space<vmem>>, vector<8x128xbf16>,
    %c45 = arith.constant 45 : index
    %411 = memref.load %arg3[%c45] : memref<48xf32, #tpu.memory_space<smem>>
    %c46 = arith.constant 46 : index
    %412 = memref.load %arg3[%c46] : memref<48xf32, #tpu.memory_space<smem>>
    %c47 = arith.constant 47 : index
    %413 = memref.load %arg3[%c47] : memref<48xf32, #tpu.memory_space<smem>>
    %c15_49 = arith.constant 15 : index
    %414 = memref.load %arg4[%c15_49] : memref<16xf32, #tpu.memory_space<smem>>
    %415 = vector.broadcast %411 : f32 to vector<8x128xf32>
    %416 = arith.mulf %415, %4 : vector<8x128xf32>
    %417 = vector.broadcast %412 : f32 to vector<8x128xf32>
    %418 = arith.mulf %417, %1 : vector<8x128xf32>
    %419 = arith.addf %416, %418 : vector<8x128xf32>
    %420 = vector.broadcast %413 : f32 to vector<8x128xf32>
    %421 = arith.mulf %420, %3 : vector<8x128xf32>
    %422 = arith.addf %419, %421 : vector<8x128xf32>
    %423 = vector.broadcast %411 : f32 to vector<8x128xf32>
    %424 = arith.mulf %423, %1 : vector<8x128xf32>
    %425 = vector.broadcast %412 : f32 to vector<8x128xf32>
    %426 = arith.mulf %425, %3 : vector<8x128xf32>
    %427 = arith.addf %424, %426 : vector<8x128xf32>
    %428 = vector.broadcast %413 : f32 to vector<8x128xf32>
    %429 = arith.mulf %428, %5 : vector<8x128xf32>
    %430 = arith.addf %427, %429 : vector<8x128xf32>
    %431 = arith.maximumf %422, %430 : vector<8x128xf32>
    %432 = vector.broadcast %414 : f32 to vector<8x128xf32>
    %433 = arith.addf %431, %432 : vector<8x128xf32>
    %cst_50 = arith.constant 0.000000e+00 : f32
    %434 = vector.broadcast %cst_50 : f32 to vector<8x128xf32>
    %435 = arith.maximumf %433, %434 : vector<8x128xf32>
    %436 = arith.truncf %435 : vector<8x128xf32> to vector<8x128xbf16>
    %c0_51 = arith.constant 0 : index
    %c1920 = arith.constant 1920 : index
    %437 = vector.load %arg10[%c0_51, %c1920] : memref<8x2048xbf16, #tpu.memory_space<vmem>>, vector<8x128xbf16>
    tpu.vector_store %arg10[%c0_51, %c1920], %436 {strides = array<i32>} : memref<8x2048xbf16, #tpu.memory_space<vmem>>, vector<8x128xbf16>,
    %c0_52 = arith.constant 0 : index
    %c0_53 = arith.constant 0 : index
    %438 = vector.load %arg10[%c0_52, %c0_53] : memref<8x2048xbf16, #tpu.memory_space<vmem>>, vector<8x2048xbf16>
    %c0_54 = arith.constant 0 : index
    %c0_55 = arith.constant 0 : index
    %439 = vector.load %arg5[%c0_54, %c0_55] : memref<2048x64xbf16, #tpu.memory_space<vmem>>, vector<2048x64xbf16>
    %cst_56 = arith.constant dense<0.000000e+00> : vector<8x64xf32>
    %440 = tpu.matmul %438, %439, %cst_56 {dimension_numbers = #tpu.dot_dimension_numbers<[1], [0], [0], [1], [0, 0, 1, 1], [], []>} : vector<8x2048xbf16>, vector<2048x64xbf16>, vector<8x64xf32> -> vector<8x64xf32>
    %c0_57 = arith.constant 0 : index
    %c0_58 = arith.constant 0 : index
    %441 = vector.load %arg6[%c0_57, %c0_58] : memref<1x64xf32, #tpu.memory_space<vmem>>, vector<1x64xf32>
    %442 = vector.broadcast %441 : vector<1x64xf32> to vector<8x64xf32>
    %443 = arith.addf %440, %442 : vector<8x64xf32>
    %cst_59 = arith.constant 0.000000e+00 : f32
    %444 = vector.broadcast %cst_59 : f32 to vector<8x64xf32>
    %445 = arith.maximumf %443, %444 : vector<8x64xf32>
    %446 = arith.truncf %445 : vector<8x64xf32> to vector<8x64xbf16>
    %c0_60 = arith.constant 0 : index
    %c0_61 = arith.constant 0 : index
    %447 = vector.load %arg7[%c0_60, %c0_61] : memref<64x128xbf16, #tpu.memory_space<vmem>>, vector<64x128xbf16>
    %cst_62 = arith.constant dense<0.000000e+00> : vector<8x128xf32>
    %448 = tpu.matmul %446, %447, %cst_62 {dimension_numbers = #tpu.dot_dimension_numbers<[1], [0], [0], [1], [0, 0, 1, 1], [], []>} : vector<8x64xbf16>, vector<64x128xbf16>, vector<8x128xf32> -> vector<8x128xf32>
    %c0_63 = arith.constant 0 : index
    %c0_64 = arith.constant 0 : index
    %449 = vector.load %arg8[%c0_63, %c0_64] : memref<1x128xf32, #tpu.memory_space<vmem>>, vector<1x128xf32>
    %450 = vector.broadcast %449 : vector<1x128xf32> to vector<8x128xf32>
    %451 = arith.addf %448, %450 : vector<8x128xf32>
    %c0_65 = arith.constant 0 : index
    %c0_66 = arith.constant 0 : index
    %452 = vector.load %arg9[%c0_65, %c0_66] : memref<8x128xf32, #tpu.memory_space<vmem>>, vector<8x128xf32>
    tpu.vector_store %arg9[%c0_65, %c0_66], %451 {strides = array<i32>} : memref<8x128xf32, #tpu.memory_space<vmem>>, vector<8x128xf32>,
    return
  }
  func.func @transform_0(%arg0: i32) -> (i32, i32) {
    %c0_i32 = arith.constant 0 : i32
    %c0_i32_0 = arith.constant 0 : i32
    return %arg0, %c0_i32 : i32, i32
  }
  func.func @transform_1(%arg0: i32) -> (i32, i32) {
    %c0_i32 = arith.constant 0 : i32
    %c0_i32_0 = arith.constant 0 : i32
    return %arg0, %c0_i32 : i32, i32
  }
  func.func @transform_2(%arg0: i32) -> i32 {
    %c0_i32 = arith.constant 0 : i32
    %c0_i32_0 = arith.constant 0 : i32
    return %c0_i32 : i32
  }
  func.func @transform_3(%arg0: i32) -> i32 {
    %c0_i32 = arith.constant 0 : i32
    %c0_i32_0 = arith.constant 0 : i32
    return %c0_i32 : i32
  }
  func.func @transform_4(%arg0: i32) -> (i32, i32) {
    %c0_i32 = arith.constant 0 : i32
    %c0_i32_0 = arith.constant 0 : i32
    %c0_i32_1 = arith.constant 0 : i32
    return %c0_i32, %c0_i32_0 : i32, i32
  }
  func.func @transform_5(%arg0: i32) -> (i32, i32) {
    %c0_i32 = arith.constant 0 : i32
    %c0_i32_0 = arith.constant 0 : i32
    %c0_i32_1 = arith.constant 0 : i32
    return %c0_i32, %c0_i32_0 : i32, i32
  }
  func.func @transform_6(%arg0: i32) -> (i32, i32) {
    %c0_i32 = arith.constant 0 : i32
    %c0_i32_0 = arith.constant 0 : i32
    %c0_i32_1 = arith.constant 0 : i32
    return %c0_i32, %c0_i32_0 : i32, i32
  }
  func.func @transform_7(%arg0: i32) -> (i32, i32) {
    %c0_i32 = arith.constant 0 : i32
    %c0_i32_0 = arith.constant 0 : i32
    %c0_i32_1 = arith.constant 0 : i32
    return %c0_i32, %c0_i32_0 : i32, i32
  }
  func.func @transform_8(%arg0: i32) -> (i32, i32) {
    %c0_i32 = arith.constant 0 : i32
    %c0_i32_0 = arith.constant 0 : i32
    return %arg0, %c0_i32 : i32, i32
  }
}

</mosaic_0001>

<llo_original>
// kernel: social_cnn_forward.1
$region0: #{social_cnn_forward.1}
  #allocation0 [shape = 'u32[]', space=smem, size = 0x4, offset = 0x4, fixed_abs, tag = 'smem constant byte address 0x4 - core index']
  #allocation1 [shape = 'u32[72,128]{1,0:T(1,128)}', space=vmem, size = 0x9000, scoped, tag = 'internal scratch']
  #allocation2 [shape = 'bf16[8,2048]{1,0:T(8,128)(2,1)}', space=vmem, size = 0x8000, scoped, tag = 'scratch operand']
  %s0 = inlined_call_operand.vmem [shape: bf16[8,128], index: 0, kind: input, shape index: {}]
  %s1 = inlined_call_operand.vmem [shape: bf16[8,128], index: 1, kind: input, shape index: {}]
  %s2 = inlined_call_operand.vmem [shape: f32[48], index: 2, kind: input, shape index: {}]
  %s3 = inlined_call_operand.vmem [shape: f32[16], index: 3, kind: input, shape index: {}]
  %s4 = inlined_call_operand.vmem [shape: bf16[2048,64], index: 4, kind: input, shape index: {}]
  %s5 = inlined_call_operand.vmem [shape: f32[1,64], index: 5, kind: input, shape index: {}]
  %s6 = inlined_call_operand.vmem [shape: bf16[64,128], index: 6, kind: input, shape index: {}]
  %s7 = inlined_call_operand.vmem [shape: f32[1,128], index: 7, kind: input, shape index: {}]
  %s8 = inlined_call_operand.vmem [shape: f32[8,128], index: 8, kind: output, shape index: {}]
  %s9 = sld [smem:[#allocation0]]
  $region50: #{social_cnn_forward.1} parent=0
    _
  %s11 = ssub.s32 1, %s9
  %s12 = scalar_select 0, %s11, %s9
  $region1: #{social_cnn_forward.1} parent=0
    #allocation3 [shape = 'u8[512]{0}', space=smem, size = 0x200, scoped, tag = 'input window, operand 2, single buffered']
    #allocation4 [shape = 's32[1]{0}', space=sflag, size = 0x4, scoped, tag = 'scoped memory for social_cnn_forward.1']
    #allocation5 [shape = 'u8[512]{0}', space=smem, size = 0x200, scoped, tag = 'input window, operand 3, single buffered']
    #allocation6 [shape = 's32[1]{0}', space=sflag, size = 0x4, scoped, tag = 'scoped memory for social_cnn_forward.1']
    %13 = vsyncpa [#allocation4], 0
    %14 = vsyncpa [#allocation6], 0
    // Predicated region
    $region2: #{social_cnn_forward.1} parent=1 // pred_check
      _
    $region3: #{social_cnn_forward.1} parent=1 // pred_check_branch
      %16 = sbr.rel (0) target = $region5
    $region4: #{social_cnn_forward.1} parent=1 // pred_region
      _
    $region5: #{social_cnn_forward.1} parent=1 // pred_fallthru
      _
    // Predicated region
    $region6: #{social_cnn_forward.1} parent=1 // pred_check
      _
    $region7: #{social_cnn_forward.1} parent=1 // pred_check_branch
      %18 = sbr.rel (0) target = $region9
    $region8: #{social_cnn_forward.1} parent=1 // pred_region
      _
    $region9: #{social_cnn_forward.1} parent=1 // pred_fallthru
      _
    // Predicated region
    $region10: #{social_cnn_forward.1} parent=1 // pred_check
      _
    $region11: #{social_cnn_forward.1} parent=1 // pred_check_branch
      %20 = sbr.rel (0) target = $region13
    $region12: #{social_cnn_forward.1} parent=1 // pred_region
      %22 = vsyncadd [#allocation4], 0
      %s24 = sshll.u32 %s2, 4
      %s25 = int_to_ptr.vmem [resolvable:$true] %s24
      %27 = dma.vmem_to_smem %s25, 16, [#allocation3], [#allocation4]
    $region13: #{social_cnn_forward.1} parent=1 // pred_fallthru
      _
    // Predicated region
    $region14: #{social_cnn_forward.1} parent=1 // pred_check
      _
    $region15: #{social_cnn_forward.1} parent=1 // pred_check_branch
      %29 = sbr.rel (0) target = $region17
    $region16: #{social_cnn_forward.1} parent=1 // pred_region
      %31 = vsyncadd [#allocation6], 0
      %s33 = sshll.u32 %s3, 4
      %s34 = int_to_ptr.vmem [resolvable:$true] %s33
      %36 = dma.vmem_to_smem %s34, 16, [#allocation5], [#allocation6]
    $region17: #{social_cnn_forward.1} parent=1 // pred_fallthru
      _
    // Predicated region
    $region18: #{social_cnn_forward.1} parent=1 // pred_check
      _
    $region19: #{social_cnn_forward.1} parent=1 // pred_check_branch
      %38 = sbr.rel (0) target = $region21
    $region20: #{social_cnn_forward.1} parent=1 // pred_region
      _
    $region21: #{social_cnn_forward.1} parent=1 // pred_fallthru
      _
    // Predicated region
    $region22: #{social_cnn_forward.1} parent=1 // pred_check
      _
    $region23: #{social_cnn_forward.1} parent=1 // pred_check_branch
      %40 = sbr.rel (0) target = $region25
    $region24: #{social_cnn_forward.1} parent=1 // pred_region
      _
    $region25: #{social_cnn_forward.1} parent=1 // pred_fallthru
      _
    // Predicated region
    $region26: #{social_cnn_forward.1} parent=1 // pred_check
      _
    $region27: #{social_cnn_forward.1} parent=1 // pred_check_branch
      %42 = sbr.rel (0) target = $region29
    $region28: #{social_cnn_forward.1} parent=1 // pred_region
      _
    $region29: #{social_cnn_forward.1} parent=1 // pred_fallthru
      _
    // Predicated region
    $region30: #{social_cnn_forward.1} parent=1 // pred_check
      _
    $region31: #{social_cnn_forward.1} parent=1 // pred_check_branch
      %44 = sbr.rel (0) target = $region33
    $region32: #{social_cnn_forward.1} parent=1 // pred_region
      _
    $region33: #{social_cnn_forward.1} parent=1 // pred_fallthru
      _
    // Predicated region
    $region34: #{social_cnn_forward.1} parent=1 // pred_check
      _
    $region35: #{social_cnn_forward.1} parent=1 // pred_check_branch
      %46 = sbr.rel (0) target = $region37
    $region36: #{social_cnn_forward.1} parent=1 // pred_region
      %48 = dma.done [#allocation4], 16
    $region37: #{social_cnn_forward.1} parent=1 // pred_fallthru
      _
    // Predicated region
    $region38: #{social_cnn_forward.1} parent=1 // pred_check
      _
    $region39: #{social_cnn_forward.1} parent=1 // pred_check_branch
      %50 = sbr.rel (0) target = $region41
    $region40: #{social_cnn_forward.1} parent=1 // pred_region
      %52 = dma.done [#allocation6], 16
    $region41: #{social_cnn_forward.1} parent=1 // pred_fallthru
      _
    %53 = sfence
    %v55 = vld [vmem:[%s0] sm:$0xf]
    %v56 = vunpack.c.l.bf16 %v55
    %v57 = vld [vmem:[%s1] sm:$0xf]
    %v58 = vunpack.c.l.bf16 %v57
    %59 = vrot.lane.b32.xlu0 %v58, 1
    %v60 = vpop.permute.xlu0 %59
    %61 = vrot.lane.b32.xlu0 %v56, 127
    %v62 = vpop.permute.xlu0 %61
    %s63 = sld [smem:[#allocation3]]
    %s64 = sld [smem:[#allocation3 + $0x1]]
    %s65 = sld [smem:[#allocation3 + $0x2]]
    %s66 = sld [smem:[#allocation5]]
    %v67 = vstv %s63
    %v68 = vmul.f32 %v67, %v60
    %v69 = vstv %s64
    %v70 = vmul.f32 %v69, %v56
    %v71 = vadd.f32 %v68, %v70
    %v72 = vstv %s65
    %v73 = vmul.f32 %v72, %v58
    %v74 = vadd.f32 %v71, %v73
    %v75 = vmul.f32 %v67, %v56
    %v76 = vmul.f32 %v69, %v58
    %v77 = vadd.f32 %v75, %v76
    %v78 = vmul.f32 %v72, %v62
    %v79 = vadd.f32 %v77, %v78
    %v80 = vmax.f32 %v74, %v79
    %v81 = vstv %s66
    %v82 = vadd.f32 %v80, %v81
    %v83 = vmax.f32 %v82, 0.0
    %v84 = vpack.c.bf16 %v83, %v83
    %85 = vst [vmem:[#allocation2] sm:$0xf] %v84
    %s86 = sld [smem:[#allocation3 + $0x3]]
    %s87 = sld [smem:[#allocation3 + $0x4]]
    %s88 = sld [smem:[#allocation3 + $0x5]]
    %s89 = sld [smem:[#allocation5 + $0x1]]
    %v90 = vstv %s86
    %v91 = vmul.f32 %v90, %v60
    %v92 = vstv %s87
    %v93 = vmul.f32 %v92, %v56
    %v94 = vadd.f32 %v91, %v93
    %v95 = vstv %s88
    %v96 = vmul.f32 %v95, %v58
    %v97 = vadd.f32 %v94, %v96
    %v98 = vmul.f32 %v90, %v56
    %v99 = vmul.f32 %v92, %v58
    %v100 = vadd.f32 %v98, %v99
    %v101 = vmul.f32 %v95, %v62
    %v102 = vadd.f32 %v100, %v101
    %v103 = vmax.f32 %v97, %v102
    %v104 = vstv %s89
    %v105 = vadd.f32 %v103, %v104
    %v106 = vmax.f32 %v105, 0.0
    %v107 = vpack.c.bf16 %v106, %v106
    %108 = vst [vmem:[#allocation2 + $0x4] sm:$0xf] %v107
    %s109 = sld [smem:[#allocation3 + $0x6]]
    %s110 = sld [smem:[#allocation3 + $0x7]]
    %s111 = sld [smem:[#allocation3 + $0x8]]
    %s112 = sld [smem:[#allocation5 + $0x2]]
    %v113 = vstv %s109
    %v114 = vmul.f32 %v113, %v60
    %v115 = vstv %s110
    %v116 = vmul.f32 %v115, %v56
    %v117 = vadd.f32 %v114, %v116
    %v118 = vstv %s111
    %v119 = vmul.f32 %v118, %v58
    %v120 = vadd.f32 %v117, %v119
    %v121 = vmul.f32 %v113, %v56
    %v122 = vmul.f32 %v115, %v58
    %v123 = vadd.f32 %v121, %v122
    %v124 = vmul.f32 %v118, %v62
    %v125 = vadd.f32 %v123, %v124
    %v126 = vmax.f32 %v120, %v125
    %v127 = vstv %s112
    %v128 = vadd.f32 %v126, %v127
    %v129 = vmax.f32 %v128, 0.0
    %v130 = vpack.c.bf16 %v129, %v129
    %131 = vst [vmem:[#allocation2 + $0x8] sm:$0xf] %v130
    %s132 = sld [smem:[#allocation3 + $0x9]]
    %s133 = sld [smem:[#allocation3 + $0xa]]
    %s134 = sld [smem:[#allocation3 + $0xb]]
    %s135 = sld [smem:[#allocation5 + $0x3]]
    %v136 = vstv %s132
    %v137 = vmul.f32 %v136, %v60
    %v138 = vstv %s133
    %v139 = vmul.f32 %v138, %v56
    %v140 = vadd.f32 %v137, %v139
    %v141 = vstv %s134
    %v142 = vmul.f32 %v141, %v58
    %v143 = vadd.f32 %v140, %v142
    %v144 = vmul.f32 %v136, %v56
    %v145 = vmul.f32 %v138, %v58
    %v146 = vadd.f32 %v144, %v145
    %v147 = vmul.f32 %v141, %v62
    %v148 = vadd.f32 %v146, %v147
    %v149 = vmax.f32 %v143, %v148
    %v150 = vstv %s135
    %v151 = vadd.f32 %v149, %v150
    %v152 = vmax.f32 %v151, 0.0
    %v153 = vpack.c.bf16 %v152, %v152
    %154 = vst [vmem:[#allocation2 + $0xc] sm:$0xf] %v153
    %s155 = sld [smem:[#allocation3 + $0xc]]
    %s156 = sld [smem:[#allocation3 + $0xd]]
    %s157 = sld [smem:[#allocation3 + $0xe]]
    %s158 = sld [smem:[#allocation5 + $0x4]]
    %v159 = vstv %s155
    %v160 = vmul.f32 %v159, %v60
    %v161 = vstv %s156
    %v162 = vmul.f32 %v161, %v56
    %v163 = vadd.f32 %v160, %v162
    %v164 = vstv %s157
    %v165 = vmul.f32 %v164, %v58
    %v166 = vadd.f32 %v163, %v165
    %v167 = vmul.f32 %v159, %v56
    %v168 = vmul.f32 %v161, %v58
    %v169 = vadd.f32 %v167, %v168
    %v170 = vmul.f32 %v164, %v62
    %v171 = vadd.f32 %v169, %v170
    %v172 = vmax.f32 %v166, %v171
    %v173 = vstv %s158
    %v174 = vadd.f32 %v172, %v173
    %v175 = vmax.f32 %v174, 0.0
    %v176 = vpack.c.bf16 %v175, %v175
    %177 = vst [vmem:[#allocation2 + $0x10] sm:$0xf] %v176
    %s178 = sld [smem:[#allocation3 + $0xf]]
    %s179 = sld [smem:[#allocation3 + $0x10]]
    %s180 = sld [smem:[#allocation3 + $0x11]]
    %s181 = sld [smem:[#allocation5 + $0x5]]
    %v182 = vstv %s178
    %v183 = vmul.f32 %v182, %v60
    %v184 = vstv %s179
    %v185 = vmul.f32 %v184, %v56
    %v186 = vadd.f32 %v183, %v185
    %v187 = vstv %s180
    %v188 = vmul.f32 %v187, %v58
    %v189 = vadd.f32 %v186, %v188
    %v190 = vmul.f32 %v182, %v56
    %v191 = vmul.f32 %v184, %v58
    %v192 = vadd.f32 %v190, %v191
    %v193 = vmul.f32 %v187, %v62
    %v194 = vadd.f32 %v192, %v193
    %v195 = vmax.f32 %v189, %v194
    %v196 = vstv %s181
    %v197 = vadd.f32 %v195, %v196
    %v198 = vmax.f32 %v197, 0.0
    %v199 = vpack.c.bf16 %v198, %v198
    %200 = vst [vmem:[#allocation2 + $0x14] sm:$0xf] %v199
    %s201 = sld [smem:[#allocation3 + $0x12]]
    %s202 = sld [smem:[#allocation3 + $0x13]]
    %s203 = sld [smem:[#allocation3 + $0x14]]
    %s204 = sld [smem:[#allocation5 + $0x6]]
    %v205 = vstv %s201
    %v206 = vmul.f32 %v205, %v60
    %v207 = vstv %s202
    %v208 = vmul.f32 %v207, %v56
    %v209 = vadd.f32 %v206, %v208
    %v210 = vstv %s203
    %v211 = vmul.f32 %v210, %v58
    %v212 = vadd.f32 %v209, %v211
    %v213 = vmul.f32 %v205, %v56
    %v214 = vmul.f32 %v207, %v58
    %v215 = vadd.f32 %v213, %v214
    %v216 = vmul.f32 %v210, %v62
    %v217 = vadd.f32 %v215, %v216
    %v218 = vmax.f32 %v212, %v217
    %v219 = vstv %s204
    %v220 = vadd.f32 %v218, %v219
    %v221 = vmax.f32 %v220, 0.0
    %v222 = vpack.c.bf16 %v221, %v221
    %223 = vst [vmem:[#allocation2 + $0x18] sm:$0xf] %v222
    %s224 = sld [smem:[#allocation3 + $0x15]]
    %s225 = sld [smem:[#allocation3 + $0x16]]
    %s226 = sld [smem:[#allocation3 + $0x17]]
    %s227 = sld [smem:[#allocation5 + $0x7]]
    %v228 = vstv %s224
    %v229 = vmul.f32 %v228, %v60
    %v230 = vstv %s225
    %v231 = vmul.f32 %v230, %v56
    %v232 = vadd.f32 %v229, %v231
    %v233 = vstv %s226
    %v234 = vmul.f32 %v233, %v58
    %v235 = vadd.f32 %v232, %v234
    %v236 = vmul.f32 %v228, %v56
    %v237 = vmul.f32 %v230, %v58
    %v238 = vadd.f32 %v236, %v237
    %v239 = vmul.f32 %v233, %v62
    %v240 = vadd.f32 %v238, %v239
    %v241 = vmax.f32 %v235, %v240
    %v242 = vstv %s227
    %v243 = vadd.f32 %v241, %v242
    %v244 = vmax.f32 %v243, 0.0
    %v245 = vpack.c.bf16 %v244, %v244
    %246 = vst [vmem:[#allocation2 + $0x1c] sm:$0xf] %v245
    %s247 = sld [smem:[#allocation3 + $0x18]]
    %s248 = sld [smem:[#allocation3 + $0x19]]
    %s249 = sld [smem:[#allocation3 + $0x1a]]
    %s250 = sld [smem:[#allocation5 + $0x8]]
    %v251 = vstv %s247
    %v252 = vmul.f32 %v251, %v60
    %v253 = vstv %s248
    %v254 = vmul.f32 %v253, %v56
    %v255 = vadd.f32 %v252, %v254
    %v256 = vstv %s249
    %v257 = vmul.f32 %v256, %v58
    %v258 = vadd.f32 %v255, %v257
    %v259 = vmul.f32 %v251, %v56
    %v260 = vmul.f32 %v253, %v58
    %v261 = vadd.f32 %v259, %v260
    %v262 = vmul.f32 %v256, %v62
    %v263 = vadd.f32 %v261, %v262
    %v264 = vmax.f32 %v258, %v263
    %v265 = vstv %s250
    %v266 = vadd.f32 %v264, %v265
    %v267 = vmax.f32 %v266, 0.0
    %v268 = vpack.c.bf16 %v267, %v267
    %269 = vst [vmem:[#allocation2 + $0x20] sm:$0xf] %v268
    %s270 = sld [smem:[#allocation3 + $0x1b]]
    %s271 = sld [smem:[#allocation3 + $0x1c]]
    %s272 = sld [smem:[#allocation3 + $0x1d]]
    %s273 = sld [smem:[#allocation5 + $0x9]]
    %v274 = vstv %s270
    %v275 = vmul.f32 %v274, %v60
    %v276 = vstv %s271
    %v277 = vmul.f32 %v276, %v56
    %v278 = vadd.f32 %v275, %v277
    %v279 = vstv %s272
    %v280 = vmul.f32 %v279, %v58
    %v281 = vadd.f32 %v278, %v280
    %v282 = vmul.f32 %v274, %v56
    %v283 = vmul.f32 %v276, %v58
    %v284 = vadd.f32 %v282, %v283
    %v285 = vmul.f32 %v279, %v62
    %v286 = vadd.f32 %v284, %v285
    %v287 = vmax.f32 %v281, %v286
    %v288 = vstv %s273
    %v289 = vadd.f32 %v287, %v288
    %v290 = vmax.f32 %v289, 0.0
    %v291 = vpack.c.bf16 %v290, %v290
    %292 = vst [vmem:[#allocation2 + $0x24] sm:$0xf] %v291
    %s293 = sld [smem:[#allocation3 + $0x1e]]
    %s294 = sld [smem:[#allocation3 + $0x1f]]
    %s295 = sld [smem:[#allocation3 + $0x20]]
    %s296 = sld [smem:[#allocation5 + $0xa]]
    %v297 = vstv %s293
    %v298 = vmul.f32 %v297, %v60
    %v299 = vstv %s294
    %v300 = vmul.f32 %v299, %v56
    %v301 = vadd.f32 %v298, %v300
    %v302 = vstv %s295
    %v303 = vmul.f32 %v302, %v58
    %v304 = vadd.f32 %v301, %v303
    %v305 = vmul.f32 %v297, %v56
    %v306 = vmul.f32 %v299, %v58
    %v307 = vadd.f32 %v305, %v306
    %v308 = vmul.f32 %v302, %v62
    %v309 = vadd.f32 %v307, %v308
    %v310 = vmax.f32 %v304, %v309
    %v311 = vstv %s296
    %v312 = vadd.f32 %v310, %v311
    %v313 = vmax.f32 %v312, 0.0
    %v314 = vpack.c.bf16 %v313, %v313
    %315 = vst [vmem:[#allocation2 + $0x28] sm:$0xf] %v314
    %s316 = sld [smem:[#allocation3 + $0x21]]
    %s317 = sld [smem:[#allocation3 + $0x22]]
    %s318 = sld [smem:[#allocation3 + $0x23]]
    %s319 = sld [smem:[#allocation5 + $0xb]]
    %v320 = vstv %s316
    %v321 = vmul.f32 %v320, %v60
    %v322 = vstv %s317
    %v323 = vmul.f32 %v322, %v56
    %v324 = vadd.f32 %v321, %v323
    %v325 = vstv %s318
    %v326 = vmul.f32 %v325, %v58
    %v327 = vadd.f32 %v324, %v326
    %v328 = vmul.f32 %v320, %v56
    %v329 = vmul.f32 %v322, %v58
    %v330 = vadd.f32 %v328, %v329
    %v331 = vmul.f32 %v325, %v62
    %v332 = vadd.f32 %v330, %v331
    %v333 = vmax.f32 %v327, %v332
    %v334 = vstv %s319
    %v335 = vadd.f32 %v333, %v334
    %v336 = vmax.f32 %v335, 0.0
    %v337 = vpack.c.bf16 %v336, %v336
    %338 = vst [vmem:[#allocation2 + $0x2c] sm:$0xf] %v337
    %s339 = sld [smem:[#allocation3 + $0x24]]
    %s340 = sld [smem:[#allocation3 + $0x25]]
    %s341 = sld [smem:[#allocation3 + $0x26]]
    %s342 = sld [smem:[#allocation5 + $0xc]]
    %v343 = vstv %s339
    %v344 = vmul.f32 %v343, %v60
    %v345 = vstv %s340
    %v346 = vmul.f32 %v345, %v56
    %v347 = vadd.f32 %v344, %v346
    %v348 = vstv %s341
    %v349 = vmul.f32 %v348, %v58
    %v350 = vadd.f32 %v347, %v349
    %v351 = vmul.f32 %v343, %v56
    %v352 = vmul.f32 %v345, %v58
    %v353 = vadd.f32 %v351, %v352
    %v354 = vmul.f32 %v348, %v62
    %v355 = vadd.f32 %v353, %v354
    %v356 = vmax.f32 %v350, %v355
    %v357 = vstv %s342
    %v358 = vadd.f32 %v356, %v357
    %v359 = vmax.f32 %v358, 0.0
    %v360 = vpack.c.bf16 %v359, %v359
    %361 = vst [vmem:[#allocation2 + $0x30] sm:$0xf] %v360
    %s362 = sld [smem:[#allocation3 + $0x27]]
    %s363 = sld [smem:[#allocation3 + $0x28]]
    %s364 = sld [smem:[#allocation3 + $0x29]]
    %s365 = sld [smem:[#allocation5 + $0xd]]
    %v366 = vstv %s362
    %v367 = vmul.f32 %v366, %v60
    %v368 = vstv %s363
    %v369 = vmul.f32 %v368, %v56
    %v370 = vadd.f32 %v367, %v369
    %v371 = vstv %s364
    %v372 = vmul.f32 %v371, %v58
    %v373 = vadd.f32 %v370, %v372
    %v374 = vmul.f32 %v366, %v56
    %v375 = vmul.f32 %v368, %v58
    %v376 = vadd.f32 %v374, %v375
    %v377 = vmul.f32 %v371, %v62
    %v378 = vadd.f32 %v376, %v377
    %v379 = vmax.f32 %v373, %v378
    %v380 = vstv %s365
    %v381 = vadd.f32 %v379, %v380
    %v382 = vmax.f32 %v381, 0.0
    %v383 = vpack.c.bf16 %v382, %v382
    %384 = vst [vmem:[#allocation2 + $0x34] sm:$0xf] %v383
    %s385 = sld [smem:[#allocation3 + $0x2a]]
    %s386 = sld [smem:[#allocation3 + $0x2b]]
    %s387 = sld [smem:[#allocation3 + $0x2c]]
    %s388 = sld [smem:[#allocation5 + $0xe]]
    %v389 = vstv %s385
    %v390 = vmul.f32 %v389, %v60
    %v391 = vstv %s386
    %v392 = vmul.f32 %v391, %v56
    %v393 = vadd.f32 %v390, %v392
    %v394 = vstv %s387
    %v395 = vmul.f32 %v394, %v58
    %v396 = vadd.f32 %v393, %v395
    %v397 = vmul.f32 %v389, %v56
    %v398 = vmul.f32 %v391, %v58
    %v399 = vadd.f32 %v397, %v398
    %v400 = vmul.f32 %v394, %v62
    %v401 = vadd.f32 %v399, %v400
    %v402 = vmax.f32 %v396, %v401
    %v403 = vstv %s388
    %v404 = vadd.f32 %v402, %v403
    %v405 = vmax.f32 %v404, 0.0
    %v406 = vpack.c.bf16 %v405, %v405
    %407 = vst [vmem:[#allocation2 + $0x38] sm:$0xf] %v406
    %s408 = sld [smem:[#allocation3 + $0x2d]]
    %s409 = sld [smem:[#allocation3 + $0x2e]]
    %s410 = sld [smem:[#allocation3 + $0x2f]]
    %s411 = sld [smem:[#allocation5 + $0xf]]
    %v412 = vstv %s408
    %v413 = vmul.f32 %v412, %v60
    %v414 = vstv %s409
    %v415 = vmul.f32 %v414, %v56
    %v416 = vadd.f32 %v413, %v415
    %v417 = vstv %s410
    %v418 = vmul.f32 %v417, %v58
    %v419 = vadd.f32 %v416, %v418
    %v420 = vmul.f32 %v412, %v56
    %v421 = vmul.f32 %v414, %v58
    %v422 = vadd.f32 %v420, %v421
    %v423 = vmul.f32 %v417, %v62
    %v424 = vadd.f32 %v422, %v423
    %v425 = vmax.f32 %v419, %v424
    %v426 = vstv %s411
    %v427 = vadd.f32 %v425, %v426
    %v428 = vmax.f32 %v427, 0.0
    %v429 = vpack.c.bf16 %v428, %v428
    %430 = vst [vmem:[#allocation2 + $0x3c] sm:$0xf] %v429
    %v431 = vld [vmem:[#allocation2] sm:$0xff]
    %v432 = vld [vmem:[#allocation2 + $0x8] sm:$0xff]
    %v433 = vld [vmem:[#allocation2 + $0x10] sm:$0xff]
    %v434 = vld [vmem:[#allocation2 + $0x18] sm:$0xff]
    %v435 = vld [vmem:[#allocation2 + $0x20] sm:$0xff]
    %v436 = vld [vmem:[#allocation2 + $0x28] sm:$0xff]
    %v437 = vld [vmem:[#allocation2 + $0x30] sm:$0xff]
    %v438 = vld [vmem:[#allocation2 + $0x38] sm:$0xff]
    %v439 = vld [vmem:[%s4] sm:$0xf]
    %v440 = vld [vmem:[%s4 + $0x4] sm:$0xf]
    %v441 = vld [vmem:[%s4 + $0x8] sm:$0xf]
    %v442 = vld [vmem:[%s4 + $0xc] sm:$0xf]
    %v443 = vld [vmem:[%s4 + $0x10] sm:$0xf]
    %v444 = vld [vmem:[%s4 + $0x14] sm:$0xf]
    %v445 = vld [vmem:[%s4 + $0x18] sm:$0xf]
    %v446 = vld [vmem:[%s4 + $0x1c] sm:$0xf]
    %v447 = vld [vmem:[%s4 + $0x20] sm:$0xf]
    %v448 = vld [vmem:[%s4 + $0x24] sm:$0xf]
    %v449 = vld [vmem:[%s4 + $0x28] sm:$0xf]
    %v450 = vld [vmem:[%s4 + $0x2c] sm:$0xf]
    %v451 = vld [vmem:[%s4 + $0x30] sm:$0xf]
    %v452 = vld [vmem:[%s4 + $0x34] sm:$0xf]
    %v453 = vld [vmem:[%s4 + $0x38] sm:$0xf]
    %v454 = vld [vmem:[%s4 + $0x3c] sm:$0xf]
    %v455 = vld [vmem:[%s4 + $0x40] sm:$0xf]
    %v456 = vld [vmem:[%s4 + $0x44] sm:$0xf]
    %v457 = vld [vmem:[%s4 + $0x48] sm:$0xf]
    %v458 = vld [vmem:[%s4 + $0x4c] sm:$0xf]
    %v459 = vld [vmem:[%s4 + $0x50] sm:$0xf]
    %v460 = vld [vmem:[%s4 + $0x54] sm:$0xf]
    %v461 = vld [vmem:[%s4 + $0x58] sm:$0xf]
    %v462 = vld [vmem:[%s4 + $0x5c] sm:$0xf]
    %v463 = vld [vmem:[%s4 + $0x60] sm:$0xf]
    %v464 = vld [vmem:[%s4 + $0x64] sm:$0xf]
    %v465 = vld [vmem:[%s4 + $0x68] sm:$0xf]
    %v466 = vld [vmem:[%s4 + $0x6c] sm:$0xf]
    %v467 = vld [vmem:[%s4 + $0x70] sm:$0xf]
    %v468 = vld [vmem:[%s4 + $0x74] sm:$0xf]
    %v469 = vld [vmem:[%s4 + $0x78] sm:$0xf]
    %v470 = vld [vmem:[%s4 + $0x7c] sm:$0xf]
    %v471 = vld [vmem:[%s4 + $0x80] sm:$0xf]
    %v472 = vld [vmem:[%s4 + $0x84] sm:$0xf]
    %v473 = vld [vmem:[%s4 + $0x88] sm:$0xf]
    %v474 = vld [vmem:[%s4 + $0x8c] sm:$0xf]
    %v475 = vld [vmem:[%s4 + $0x90] sm:$0xf]
    %v476 = vld [vmem:[%s4 + $0x94] sm:$0xf]
    %v477 = vld [vmem:[%s4 + $0x98] sm:$0xf]
    %v478 = vld [vmem:[%s4 + $0x9c] sm:$0xf]
    %v479 = vld [vmem:[%s4 + $0xa0] sm:$0xf]
    %v480 = vld [vmem:[%s4 + $0xa4] sm:$0xf]
    %v481 = vld [vmem:[%s4 + $0xa8] sm:$0xf]
    %v482 = vld [vmem:[%s4 + $0xac] sm:$0xf]
    %v483 = vld [vmem:[%s4 + $0xb0] sm:$0xf]
    %v484 = vld [vmem:[%s4 + $0xb4] sm:$0xf]
    %v485 = vld [vmem:[%s4 + $0xb8] sm:$0xf]
    %v486 = vld [vmem:[%s4 + $0xbc] sm:$0xf]
    %v487 = vld [vmem:[%s4 + $0xc0] sm:$0xf]
    %v488 = vld [vmem:[%s4 + $0xc4] sm:$0xf]
    %v489 = vld [vmem:[%s4 + $0xc8] sm:$0xf]
    %v490 = vld [vmem:[%s4 + $0xcc] sm:$0xf]
    %v491 = vld [vmem:[%s4 + $0xd0] sm:$0xf]
    %v492 = vld [vmem:[%s4 + $0xd4] sm:$0xf]
    %v493 = vld [vmem:[%s4 + $0xd8] sm:$0xf]
    %v494 = vld [vmem:[%s4 + $0xdc] sm:$0xf]
    %v495 = vld [vmem:[%s4 + $0xe0] sm:$0xf]
    %v496 = vld [vmem:[%s4 + $0xe4] sm:$0xf]
    %v497 = vld [vmem:[%s4 + $0xe8] sm:$0xf]
    %v498 = vld [vmem:[%s4 + $0xec] sm:$0xf]
    %v499 = vld [vmem:[%s4 + $0xf0] sm:$0xf]
    %v500 = vld [vmem:[%s4 + $0xf4] sm:$0xf]
    %v501 = vld [vmem:[%s4 + $0xf8] sm:$0xf]
    %v502 = vld [vmem:[%s4 + $0xfc] sm:$0xf]
    %v503 = vld [vmem:[%s4 + $0x100] sm:$0xf]
    %v504 = vld [vmem:[%s4 + $0x104] sm:$0xf]
    %v505 = vld [vmem:[%s4 + $0x108] sm:$0xf]
    %v506 = vld [vmem:[%s4 + $0x10c] sm:$0xf]
    %v507 = vld [vmem:[%s4 + $0x110] sm:$0xf]
    %v508 = vld [vmem:[%s4 + $0x114] sm:$0xf]
    %v509 = vld [vmem:[%s4 + $0x118] sm:$0xf]
    %v510 = vld [vmem:[%s4 + $0x11c] sm:$0xf]
    %v511 = vld [vmem:[%s4 + $0x120] sm:$0xf]
    %v512 = vld [vmem:[%s4 + $0x124] sm:$0xf]
    %v513 = vld [vmem:[%s4 + $0x128] sm:$0xf]
    %v514 = vld [vmem:[%s4 + $0x12c] sm:$0xf]
    %v515 = vld [vmem:[%s4 + $0x130] sm:$0xf]
    %v516 = vld [vmem:[%s4 + $0x134] sm:$0xf]
    %v517 = vld [vmem:[%s4 + $0x138] sm:$0xf]
    %v518 = vld [vmem:[%s4 + $0x13c] sm:$0xf]
    %v519 = vld [vmem:[%s4 + $0x140] sm:$0xf]
    %v520 = vld [vmem:[%s4 + $0x144] sm:$0xf]
    %v521 = vld [vmem:[%s4 + $0x148] sm:$0xf]
    %v522 = vld [vmem:[%s4 + $0x14c] sm:$0xf]
    %v523 = vld [vmem:[%s4 + $0x150] sm:$0xf]
    %v524 = vld [vmem:[%s4 + $0x154] sm:$0xf]
    %v525 = vld [vmem:[%s4 + $0x158] sm:$0xf]
    %v526 = vld [vmem:[%s4 + $0x15c] sm:$0xf]
    %v527 = vld [vmem:[%s4 + $0x160] sm:$0xf]
    %v528 = vld [vmem:[%s4 + $0x164] sm:$0xf]
    %v529 = vld [vmem:[%s4 + $0x168] sm:$0xf]
    %v530 = vld [vmem:[%s4 + $0x16c] sm:$0xf]
    %v531 = vld [vmem:[%s4 + $0x170] sm:$0xf]
    %v532 = vld [vmem:[%s4 + $0x174] sm:$0xf]
    %v533 = vld [vmem:[%s4 + $0x178] sm:$0xf]
    %v534 = vld [vmem:[%s4 + $0x17c] sm:$0xf]
    %v535 = vld [vmem:[%s4 + $0x180] sm:$0xf]
    %v536 = vld [vmem:[%s4 + $0x184] sm:$0xf]
    %v537 = vld [vmem:[%s4 + $0x188] sm:$0xf]
    %v538 = vld [vmem:[%s4 + $0x18c] sm:$0xf]
    %v539 = vld [vmem:[%s4 + $0x190] sm:$0xf]
    %v540 = vld [vmem:[%s4 + $0x194] sm:$0xf]
    %v541 = vld [vmem:[%s4 + $0x198] sm:$0xf]
    %v542 = vld [vmem:[%s4 + $0x19c] sm:$0xf]
    %v543 = vld [vmem:[%s4 + $0x1a0] sm:$0xf]
    %v544 = vld [vmem:[%s4 + $0x1a4] sm:$0xf]
    %v545 = vld [vmem:[%s4 + $0x1a8] sm:$0xf]
    %v546 = vld [vmem:[%s4 + $0x1ac] sm:$0xf]
    %v547 = vld [vmem:[%s4 + $0x1b0] sm:$0xf]
    %v548 = vld [vmem:[%s4 + $0x1b4] sm:$0xf]
    %v549 = vld [vmem:[%s4 + $0x1b8] sm:$0xf]
    %v550 = vld [vmem:[%s4 + $0x1bc] sm:$0xf]
    %v551 = vld [vmem:[%s4 + $0x1c0] sm:$0xf]
    %v552 = vld [vmem:[%s4 + $0x1c4] sm:$0xf]
    %v553 = vld [vmem:[%s4 + $0x1c8] sm:$0xf]
    %v554 = vld [vmem:[%s4 + $0x1cc] sm:$0xf]
    %v555 = vld [vmem:[%s4 + $0x1d0] sm:$0xf]
    %v556 = vld [vmem:[%s4 + $0x1d4] sm:$0xf]
    %v557 = vld [vmem:[%s4 + $0x1d8] sm:$0xf]
    %v558 = vld [vmem:[%s4 + $0x1dc] sm:$0xf]
    %v559 = vld [vmem:[%s4 + $0x1e0] sm:$0xf]
    %v560 = vld [vmem:[%s4 + $0x1e4] sm:$0xf]
    %v561 = vld [vmem:[%s4 + $0x1e8] sm:$0xf]
    %v562 = vld [vmem:[%s4 + $0x1ec] sm:$0xf]
    %v563 = vld [vmem:[%s4 + $0x1f0] sm:$0xf]
    %v564 = vld [vmem:[%s4 + $0x1f4] sm:$0xf]
    %v565 = vld [vmem:[%s4 + $0x1f8] sm:$0xf]
    %v566 = vld [vmem:[%s4 + $0x1fc] sm:$0xf]
    %v567 = vld [vmem:[%s4 + $0x200] sm:$0xf]
    %v568 = vld [vmem:[%s4 + $0x204] sm:$0xf]
    %v569 = vld [vmem:[%s4 + $0x208] sm:$0xf]
    %v570 = vld [vmem:[%s4 + $0x20c] sm:$0xf]
    %v571 = vld [vmem:[%s4 + $0x210] sm:$0xf]
    %v572 = vld [vmem:[%s4 + $0x214] sm:$0xf]
    %v573 = vld [vmem:[%s4 + $0x218] sm:$0xf]
    %v574 = vld [vmem:[%s4 + $0x21c] sm:$0xf]
    %v575 = vld [vmem:[%s4 + $0x220] sm:$0xf]
    %v576 = vld [vmem:[%s4 + $0x224] sm:$0xf]
    %v577 = vld [vmem:[%s4 + $0x228] sm:$0xf]
    %v578 = vld [vmem:[%s4 + $0x22c] sm:$0xf]
    %v579 = vld [vmem:[%s4 + $0x230] sm:$0xf]
    %v580 = vld [vmem:[%s4 + $0x234] sm:$0xf]
    %v581 = vld [vmem:[%s4 + $0x238] sm:$0xf]
    %v582 = vld [vmem:[%s4 + $0x23c] sm:$0xf]
    %v583 = vld [vmem:[%s4 + $0x240] sm:$0xf]
    %v584 = vld [vmem:[%s4 + $0x244] sm:$0xf]
    %v585 = vld [vmem:[%s4 + $0x248] sm:$0xf]
    %v586 = vld [vmem:[%s4 + $0x24c] sm:$0xf]
    %v587 = vld [vmem:[%s4 + $0x250] sm:$0xf]
    %v588 = vld [vmem:[%s4 + $0x254] sm:$0xf]
    %v589 = vld [vmem:[%s4 + $0x258] sm:$0xf]
    %v590 = vld [vmem:[%s4 + $0x25c] sm:$0xf]
    %v591 = vld [vmem:[%s4 + $0x260] sm:$0xf]
    %v592 = vld [vmem:[%s4 + $0x264] sm:$0xf]
    %v593 = vld [vmem:[%s4 + $0x268] sm:$0xf]
    %v594 = vld [vmem:[%s4 + $0x26c] sm:$0xf]
    %v595 = vld [vmem:[%s4 + $0x270] sm:$0xf]
    %v596 = vld [vmem:[%s4 + $0x274] sm:$0xf]
    %v597 = vld [vmem:[%s4 + $0x278] sm:$0xf]
    %v598 = vld [vmem:[%s4 + $0x27c] sm:$0xf]
    %v599 = vld [vmem:[%s4 + $0x280] sm:$0xf]
    %v600 = vld [vmem:[%s4 + $0x284] sm:$0xf]
    %v601 = vld [vmem:[%s4 + $0x288] sm:$0xf]
    %v602 = vld [vmem:[%s4 + $0x28c] sm:$0xf]
    %v603 = vld [vmem:[%s4 + $0x290] sm:$0xf]
    %v604 = vld [vmem:[%s4 + $0x294] sm:$0xf]
    %v605 = vld [vmem:[%s4 + $0x298] sm:$0xf]
    %v606 = vld [vmem:[%s4 + $0x29c] sm:$0xf]
    %v607 = vld [vmem:[%s4 + $0x2a0] sm:$0xf]
    %v608 = vld [vmem:[%s4 + $0x2a4] sm:$0xf]
    %v609 = vld [vmem:[%s4 + $0x2a8] sm:$0xf]
    %v610 = vld [vmem:[%s4 + $0x2ac] sm:$0xf]
    %v611 = vld [vmem:[%s4 + $0x2b0] sm:$0xf]
    %v612 = vld [vmem:[%s4 + $0x2b4] sm:$0xf]
    %v613 = vld [vmem:[%s4 + $0x2b8] sm:$0xf]
    %v614 = vld [vmem:[%s4 + $0x2bc] sm:$0xf]
    %v615 = vld [vmem:[%s4 + $0x2c0] sm:$0xf]
    %v616 = vld [vmem:[%s4 + $0x2c4] sm:$0xf]
    %v617 = vld [vmem:[%s4 + $0x2c8] sm:$0xf]
    %v618 = vld [vmem:[%s4 + $0x2cc] sm:$0xf]
    %v619 = vld [vmem:[%s4 + $0x2d0] sm:$0xf]
    %v620 = vld [vmem:[%s4 + $0x2d4] sm:$0xf]
    %v621 = vld [vmem:[%s4 + $0x2d8] sm:$0xf]
    %v622 = vld [vmem:[%s4 + $0x2dc] sm:$0xf]
    %v623 = vld [vmem:[%s4 + $0x2e0] sm:$0xf]
    %v624 = vld [vmem:[%s4 + $0x2e4] sm:$0xf]
    %v625 = vld [vmem:[%s4 + $0x2e8] sm:$0xf]
    %v626 = vld [vmem:[%s4 + $0x2ec] sm:$0xf]
    %v627 = vld [vmem:[%s4 + $0x2f0] sm:$0xf]
    %v628 = vld [vmem:[%s4 + $0x2f4] sm:$0xf]
    %v629 = vld [vmem:[%s4 + $0x2f8] sm:$0xf]
    %v630 = vld [vmem:[%s4 + $0x2fc] sm:$0xf]
    %v631 = vld [vmem:[%s4 + $0x300] sm:$0xf]
    %v632 = vld [vmem:[%s4 + $0x304] sm:$0xf]
    %v633 = vld [vmem:[%s4 + $0x308] sm:$0xf]
    %v634 = vld [vmem:[%s4 + $0x30c] sm:$0xf]
    %v635 = vld [vmem:[%s4 + $0x310] sm:$0xf]
    %v636 = vld [vmem:[%s4 + $0x314] sm:$0xf]
    %v637 = vld [vmem:[%s4 + $0x318] sm:$0xf]
    %v638 = vld [vmem:[%s4 + $0x31c] sm:$0xf]
    %v639 = vld [vmem:[%s4 + $0x320] sm:$0xf]
    %v640 = vld [vmem:[%s4 + $0x324] sm:$0xf]
    %v641 = vld [vmem:[%s4 + $0x328] sm:$0xf]
    %v642 = vld [vmem:[%s4 + $0x32c] sm:$0xf]
    %v643 = vld [vmem:[%s4 + $0x330] sm:$0xf]
    %v644 = vld [vmem:[%s4 + $0x334] sm:$0xf]
    %v645 = vld [vmem:[%s4 + $0x338] sm:$0xf]
    %v646 = vld [vmem:[%s4 + $0x33c] sm:$0xf]
    %v647 = vld [vmem:[%s4 + $0x340] sm:$0xf]
    %v648 = vld [vmem:[%s4 + $0x344] sm:$0xf]
    %v649 = vld [vmem:[%s4 + $0x348] sm:$0xf]
    %v650 = vld [vmem:[%s4 + $0x34c] sm:$0xf]
    %v651 = vld [vmem:[%s4 + $0x350] sm:$0xf]
    %v652 = vld [vmem:[%s4 + $0x354] sm:$0xf]
    %v653 = vld [vmem:[%s4 + $0x358] sm:$0xf]
    %v654 = vld [vmem:[%s4 + $0x35c] sm:$0xf]
    %v655 = vld [vmem:[%s4 + $0x360] sm:$0xf]
    %v656 = vld [vmem:[%s4 + $0x364] sm:$0xf]
    %v657 = vld [vmem:[%s4 + $0x368] sm:$0xf]
    %v658 = vld [vmem:[%s4 + $0x36c] sm:$0xf]
    %v659 = vld [vmem:[%s4 + $0x370] sm:$0xf]
    %v660 = vld [vmem:[%s4 + $0x374] sm:$0xf]
    %v661 = vld [vmem:[%s4 + $0x378] sm:$0xf]
    %v662 = vld [vmem:[%s4 + $0x37c] sm:$0xf]
    %v663 = vld [vmem:[%s4 + $0x380] sm:$0xf]
    %v664 = vld [vmem:[%s4 + $0x384] sm:$0xf]
    %v665 = vld [vmem:[%s4 + $0x388] sm:$0xf]
    %v666 = vld [vmem:[%s4 + $0x38c] sm:$0xf]
    %v667 = vld [vmem:[%s4 + $0x390] sm:$0xf]
    %v668 = vld [vmem:[%s4 + $0x394] sm:$0xf]
    %v669 = vld [vmem:[%s4 + $0x398] sm:$0xf]
    %v670 = vld [vmem:[%s4 + $0x39c] sm:$0xf]
    %v671 = vld [vmem:[%s4 + $0x3a0] sm:$0xf]
    %v672 = vld [vmem:[%s4 + $0x3a4] sm:$0xf]
    %v673 = vld [vmem:[%s4 + $0x3a8] sm:$0xf]
    %v674 = vld [vmem:[%s4 + $0x3ac] sm:$0xf]
    %v675 = vld [vmem:[%s4 + $0x3b0] sm:$0xf]
    %v676 = vld [vmem:[%s4 + $0x3b4] sm:$0xf]
    %v677 = vld [vmem:[%s4 + $0x3b8] sm:$0xf]
    %v678 = vld [vmem:[%s4 + $0x3bc] sm:$0xf]
    %v679 = vld [vmem:[%s4 + $0x3c0] sm:$0xf]
    %v680 = vld [vmem:[%s4 + $0x3c4] sm:$0xf]
    %v681 = vld [vmem:[%s4 + $0x3c8] sm:$0xf]
    %v682 = vld [vmem:[%s4 + $0x3cc] sm:$0xf]
    %v683 = vld [vmem:[%s4 + $0x3d0] sm:$0xf]
    %v684 = vld [vmem:[%s4 + $0x3d4] sm:$0xf]
    %v685 = vld [vmem:[%s4 + $0x3d8] sm:$0xf]
    %v686 = vld [vmem:[%s4 + $0x3dc] sm:$0xf]
    %v687 = vld [vmem:[%s4 + $0x3e0] sm:$0xf]
    %v688 = vld [vmem:[%s4 + $0x3e4] sm:$0xf]
    %v689 = vld [vmem:[%s4 + $0x3e8] sm:$0xf]
    %v690 = vld [vmem:[%s4 + $0x3ec] sm:$0xf]
    %v691 = vld [vmem:[%s4 + $0x3f0] sm:$0xf]
    %v692 = vld [vmem:[%s4 + $0x3f4] sm:$0xf]
    %v693 = vld [vmem:[%s4 + $0x3f8] sm:$0xf]
    %v694 = vld [vmem:[%s4 + $0x3fc] sm:$0xf]
    %v695 = vld [vmem:[%s5] sm:$0x1]
    %v697 = vperm.slane %v695, 0
    %v707 = vunpack.c.l.b16 %v431
    %v708 = vunpack.c.h.b16 %v431
    %v709 = vunpack.c.l.b16 %v432
    %v710 = vunpack.c.h.b16 %v432
    %v711 = vunpack.c.l.b16 %v433
    %v712 = vunpack.c.h.b16 %v433
    %v713 = vunpack.c.l.b16 %v434
    %v714 = vunpack.c.h.b16 %v434
    %v715 = vunpack.c.l.b16 %v435
    %v716 = vunpack.c.h.b16 %v435
    %v717 = vunpack.c.l.b16 %v436
    %v718 = vunpack.c.h.b16 %v436
    %v719 = vunpack.c.l.b16 %v437
    %v720 = vunpack.c.h.b16 %v437
    %v721 = vunpack.c.l.b16 %v438
    %v722 = vunpack.c.h.b16 %v438
    %v723 = vpack.c.b16 %v707, %v707
    %v724 = vpack.c.b16 %v708, %v708
    %v725 = vpack.c.b16 %v709, %v709
    %v726 = vpack.c.b16 %v710, %v710
    %v727 = vpack.c.b16 %v711, %v711
    %v728 = vpack.c.b16 %v712, %v712
    %v729 = vpack.c.b16 %v713, %v713
    %v730 = vpack.c.b16 %v714, %v714
    %v731 = vpack.c.b16 %v715, %v715
    %v732 = vpack.c.b16 %v716, %v716
    %v733 = vpack.c.b16 %v717, %v717
    %v734 = vpack.c.b16 %v718, %v718
    %v735 = vpack.c.b16 %v719, %v719
    %v736 = vpack.c.b16 %v720, %v720
    %v737 = vpack.c.b16 %v721, %v721
    %v738 = vpack.c.b16 %v722, %v722
    %v1011 = vunpack.c.l.b16 %v439
    %v1012 = vunpack.c.l.b16 %v440
    %v1013 = vunpack.c.l.b16 %v441
    %v1014 = vunpack.c.l.b16 %v442
    %v1015 = vunpack.c.l.b16 %v443
    %v1016 = vunpack.c.l.b16 %v444
    %v1017 = vunpack.c.l.b16 %v445
    %v1018 = vunpack.c.l.b16 %v446
    %v1019 = vunpack.c.l.b16 %v447
    %v1020 = vunpack.c.l.b16 %v448
    %v1021 = vunpack.c.l.b16 %v449
    %v1022 = vunpack.c.l.b16 %v450
    %v1023 = vunpack.c.l.b16 %v451
    %v1024 = vunpack.c.l.b16 %v452
    %v1025 = vunpack.c.l.b16 %v453
    %v1026 = vunpack.c.l.b16 %v454
    %v1027 = vunpack.c.l.b16 %v455
    %v1028 = vunpack.c.l.b16 %v456
    %v1029 = vunpack.c.l.b16 %v457
    %v1030 = vunpack.c.l.b16 %v458
    %v1031 = vunpack.c.l.b16 %v459
    %v1032 = vunpack.c.l.b16 %v460
    %v1033 = vunpack.c.l.b16 %v461
    %v1034 = vunpack.c.l.b16 %v462
    %v1035 = vunpack.c.l.b16 %v463
    %v1036 = vunpack.c.l.b16 %v464
    %v1037 = vunpack.c.l.b16 %v465
    %v1038 = vunpack.c.l.b16 %v466
    %v1039 = vunpack.c.l.b16 %v467
    %v1040 = vunpack.c.l.b16 %v468
    %v1041 = vunpack.c.l.b16 %v469
    %v1042 = vunpack.c.l.b16 %v470
    %v1043 = vunpack.c.l.b16 %v471
    %v1044 = vunpack.c.l.b16 %v472
    %v1045 = vunpack.c.l.b16 %v473
    %v1046 = vunpack.c.l.b16 %v474
    %v1047 = vunpack.c.l.b16 %v475
    %v1048 = vunpack.c.l.b16 %v476
    %v1049 = vunpack.c.l.b16 %v477
    %v1050 = vunpack.c.l.b16 %v478
    %v1051 = vunpack.c.l.b16 %v479
    %v1052 = vunpack.c.l.b16 %v480
    %v1053 = vunpack.c.l.b16 %v481
    %v1054 = vunpack.c.l.b16 %v482
    %v1055 = vunpack.c.l.b16 %v483
    %v1056 = vunpack.c.l.b16 %v484
    %v1057 = vunpack.c.l.b16 %v485
    %v1058 = vunpack.c.l.b16 %v486
    %v1059 = vunpack.c.l.b16 %v487
    %v1060 = vunpack.c.l.b16 %v488
    %v1061 = vunpack.c.l.b16 %v489
    %v1062 = vunpack.c.l.b16 %v490
    %v1063 = vunpack.c.l.b16 %v491
    %v1064 = vunpack.c.l.b16 %v492
    %v1065 = vunpack.c.l.b16 %v493
    %v1066 = vunpack.c.l.b16 %v494
    %v1067 = vunpack.c.l.b16 %v495
    %v1068 = vunpack.c.l.b16 %v496
    %v1069 = vunpack.c.l.b16 %v497
    %v1070 = vunpack.c.l.b16 %v498
    %v1071 = vunpack.c.l.b16 %v499
    %v1072 = vunpack.c.l.b16 %v500
    %v1073 = vunpack.c.l.b16 %v501
    %v1074 = vunpack.c.l.b16 %v502
    %v1075 = vunpack.c.l.b16 %v503
    %v1076 = vunpack.c.l.b16 %v504
    %v1077 = vunpack.c.l.b16 %v505
    %v1078 = vunpack.c.l.b16 %v506
    %v1079 = vunpack.c.l.b16 %v507
    %v1080 = vunpack.c.l.b16 %v508
    %v1081 = vunpack.c.l.b16 %v509
    %v1082 = vunpack.c.l.b16 %v510
    %v1083 = vunpack.c.l.b16 %v511
    %v1084 = vunpack.c.l.b16 %v512
    %v1085 = vunpack.c.l.b16 %v513
    %v1086 = vunpack.c.l.b16 %v514
    %v1087 = vunpack.c.l.b16 %v515
    %v1088 = vunpack.c.l.b16 %v516
    %v1089 = vunpack.c.l.b16 %v517
    %v1090 = vunpack.c.l.b16 %v518
    %v1091 = vunpack.c.l.b16 %v519
    %v1092 = vunpack.c.l.b16 %v520
    %v1093 = vunpack.c.l.b16 %v521
    %v1094 = vunpack.c.l.b16 %v522
    %v1095 = vunpack.c.l.b16 %v523
    %v1096 = vunpack.c.l.b16 %v524
    %v1097 = vunpack.c.l.b16 %v525
    %v1098 = vunpack.c.l.b16 %v526
    %v1099 = vunpack.c.l.b16 %v527
    %v1100 = vunpack.c.l.b16 %v528
    %v1101 = vunpack.c.l.b16 %v529
    %v1102 = vunpack.c.l.b16 %v530
    %v1103 = vunpack.c.l.b16 %v531
    %v1104 = vunpack.c.l.b16 %v532
    %v1105 = vunpack.c.l.b16 %v533
    %v1106 = vunpack.c.l.b16 %v534
    %v1107 = vunpack.c.l.b16 %v535
    %v1108 = vunpack.c.l.b16 %v536
    %v1109 = vunpack.c.l.b16 %v537
    %v1110 = vunpack.c.l.b16 %v538
    %v1111 = vunpack.c.l.b16 %v539
    %v1112 = vunpack.c.l.b16 %v540
    %v1113 = vunpack.c.l.b16 %v541
    %v1114 = vunpack.c.l.b16 %v542
    %v1115 = vunpack.c.l.b16 %v543
    %v1116 = vunpack.c.l.b16 %v544
    %v1117 = vunpack.c.l.b16 %v545
    %v1118 = vunpack.c.l.b16 %v546
    %v1119 = vunpack.c.l.b16 %v547
    %v1120 = vunpack.c.l.b16 %v548
    %v1121 = vunpack.c.l.b16 %v549
    %v1122 = vunpack.c.l.b16 %v550
    %v1123 = vunpack.c.l.b16 %v551
    %v1124 = vunpack.c.l.b16 %v552
    %v1125 = vunpack.c.l.b16 %v553
    %v1126 = vunpack.c.l.b16 %v554
    %v1127 = vunpack.c.l.b16 %v555
    %v1128 = vunpack.c.l.b16 %v556
    %v1129 = vunpack.c.l.b16 %v557
    %v1130 = vunpack.c.l.b16 %v558
    %v1131 = vunpack.c.l.b16 %v559
    %v1132 = vunpack.c.l.b16 %v560
    %v1133 = vunpack.c.l.b16 %v561
    %v1134 = vunpack.c.l.b16 %v562
    %v1135 = vunpack.c.l.b16 %v563
    %v1136 = vunpack.c.l.b16 %v564
    %v1137 = vunpack.c.l.b16 %v565
    %v1138 = vunpack.c.l.b16 %v566
    %v1139 = vunpack.c.l.b16 %v567
    %v1140 = vunpack.c.l.b16 %v568
    %v1141 = vunpack.c.l.b16 %v569
    %v1142 = vunpack.c.l.b16 %v570
    %v1143 = vunpack.c.l.b16 %v571
    %v1144 = vunpack.c.l.b16 %v572
    %v1145 = vunpack.c.l.b16 %v573
    %v1146 = vunpack.c.l.b16 %v574
    %v1147 = vunpack.c.l.b16 %v575
    %v1148 = vunpack.c.l.b16 %v576
    %v1149 = vunpack.c.l.b16 %v577
    %v1150 = vunpack.c.l.b16 %v578
    %v1151 = vunpack.c.l.b16 %v579
    %v1152 = vunpack.c.l.b16 %v580
    %v1153 = vunpack.c.l.b16 %v581
    %v1154 = vunpack.c.l.b16 %v582
    %v1155 = vunpack.c.l.b16 %v583
    %v1156 = vunpack.c.l.b16 %v584
    %v1157 = vunpack.c.l.b16 %v585
    %v1158 = vunpack.c.l.b16 %v586
    %v1159 = vunpack.c.l.b16 %v587
    %v1160 = vunpack.c.l.b16 %v588
    %v1161 = vunpack.c.l.b16 %v589
    %v1162 = vunpack.c.l.b16 %v590
    %v1163 = vunpack.c.l.b16 %v591
    %v1164 = vunpack.c.l.b16 %v592
    %v1165 = vunpack.c.l.b16 %v593
    %v1166 = vunpack.c.l.b16 %v594
    %v1167 = vunpack.c.l.b16 %v595
    %v1168 = vunpack.c.l.b16 %v596
    %v1169 = vunpack.c.l.b16 %v597
    %v1170 = vunpack.c.l.b16 %v598
    %v1171 = vunpack.c.l.b16 %v599
    %v1172 = vunpack.c.l.b16 %v600
    %v1173 = vunpack.c.l.b16 %v601
    %v1174 = vunpack.c.l.b16 %v602
    %v1175 = vunpack.c.l.b16 %v603
    %v1176 = vunpack.c.l.b16 %v604
    %v1177 = vunpack.c.l.b16 %v605
    %v1178 = vunpack.c.l.b16 %v606
    %v1179 = vunpack.c.l.b16 %v607
    %v1180 = vunpack.c.l.b16 %v608
    %v1181 = vunpack.c.l.b16 %v609
    %v1182 = vunpack.c.l.b16 %v610
    %v1183 = vunpack.c.l.b16 %v611
    %v1184 = vunpack.c.l.b16 %v612
    %v1185 = vunpack.c.l.b16 %v613
    %v1186 = vunpack.c.l.b16 %v614
    %v1187 = vunpack.c.l.b16 %v615
    %v1188 = vunpack.c.l.b16 %v616
    %v1189 = vunpack.c.l.b16 %v617
    %v1190 = vunpack.c.l.b16 %v618
    %v1191 = vunpack.c.l.b16 %v619
    %v1192 = vunpack.c.l.b16 %v620
    %v1193 = vunpack.c.l.b16 %v621
    %v1194 = vunpack.c.l.b16 %v622
    %v1195 = vunpack.c.l.b16 %v623
    %v1196 = vunpack.c.l.b16 %v624
    %v1197 = vunpack.c.l.b16 %v625
    %v1198 = vunpack.c.l.b16 %v626
    %v1199 = vunpack.c.l.b16 %v627
    %v1200 = vunpack.c.l.b16 %v628
    %v1201 = vunpack.c.l.b16 %v629
    %v1202 = vunpack.c.l.b16 %v630
    %v1203 = vunpack.c.l.b16 %v631
    %v1204 = vunpack.c.l.b16 %v632
    %v1205 = vunpack.c.l.b16 %v633
    %v1206 = vunpack.c.l.b16 %v634
    %v1207 = vunpack.c.l.b16 %v635
    %v1208 = vunpack.c.l.b16 %v636
    %v1209 = vunpack.c.l.b16 %v637
    %v1210 = vunpack.c.l.b16 %v638
    %v1211 = vunpack.c.l.b16 %v639
    %v1212 = vunpack.c.l.b16 %v640
    %v1213 = vunpack.c.l.b16 %v641
    %v1214 = vunpack.c.l.b16 %v642
    %v1215 = vunpack.c.l.b16 %v643
    %v1216 = vunpack.c.l.b16 %v644
    %v1217 = vunpack.c.l.b16 %v645
    %v1218 = vunpack.c.l.b16 %v646
    %v1219 = vunpack.c.l.b16 %v647
    %v1220 = vunpack.c.l.b16 %v648
    %v1221 = vunpack.c.l.b16 %v649
    %v1222 = vunpack.c.l.b16 %v650
    %v1223 = vunpack.c.l.b16 %v651
    %v1224 = vunpack.c.l.b16 %v652
    %v1225 = vunpack.c.l.b16 %v653
    %v1226 = vunpack.c.l.b16 %v654
    %v1227 = vunpack.c.l.b16 %v655
    %v1228 = vunpack.c.l.b16 %v656
    %v1229 = vunpack.c.l.b16 %v657
    %v1230 = vunpack.c.l.b16 %v658
    %v1231 = vunpack.c.l.b16 %v659
    %v1232 = vunpack.c.l.b16 %v660
    %v1233 = vunpack.c.l.b16 %v661
    %v1234 = vunpack.c.l.b16 %v662
    %v1235 = vunpack.c.l.b16 %v663
    %v1236 = vunpack.c.l.b16 %v664
    %v1237 = vunpack.c.l.b16 %v665
    %v1238 = vunpack.c.l.b16 %v666
    %v1239 = vunpack.c.l.b16 %v667
    %v1240 = vunpack.c.l.b16 %v668
    %v1241 = vunpack.c.l.b16 %v669
    %v1242 = vunpack.c.l.b16 %v670
    %v1243 = vunpack.c.l.b16 %v671
    %v1244 = vunpack.c.l.b16 %v672
    %v1245 = vunpack.c.l.b16 %v673
    %v1246 = vunpack.c.l.b16 %v674
    %v1247 = vunpack.c.l.b16 %v675
    %v1248 = vunpack.c.l.b16 %v676
    %v1249 = vunpack.c.l.b16 %v677
    %v1250 = vunpack.c.l.b16 %v678
    %v1251 = vunpack.c.l.b16 %v679
    %v1252 = vunpack.c.l.b16 %v680
    %v1253 = vunpack.c.l.b16 %v681
    %v1254 = vunpack.c.l.b16 %v682
    %v1255 = vunpack.c.l.b16 %v683
    %v1256 = vunpack.c.l.b16 %v684
    %v1257 = vunpack.c.l.b16 %v685
    %v1258 = vunpack.c.l.b16 %v686
    %v1259 = vunpack.c.l.b16 %v687
    %v1260 = vunpack.c.l.b16 %v688
    %v1261 = vunpack.c.l.b16 %v689
    %v1262 = vunpack.c.l.b16 %v690
    %v1263 = vunpack.c.l.b16 %v691
    %v1264 = vunpack.c.l.b16 %v692
    %v1265 = vunpack.c.l.b16 %v693
    %v1266 = vunpack.c.l.b16 %v694
    %v1267 = vpack.c.b16 %v1012, %v1011
    %v1268 = vpack.c.b16 %v1014, %v1013
    %v1269 = vpack.c.b16 %v1016, %v1015
    %v1270 = vpack.c.b16 %v1018, %v1017
    %v1271 = vpack.c.b16 %v1020, %v1019
    %v1272 = vpack.c.b16 %v1022, %v1021
    %v1273 = vpack.c.b16 %v1024, %v1023
    %v1274 = vpack.c.b16 %v1026, %v1025
    %v1275 = vpack.c.b16 %v1028, %v1027
    %v1276 = vpack.c.b16 %v1030, %v1029
    %v1277 = vpack.c.b16 %v1032, %v1031
    %v1278 = vpack.c.b16 %v1034, %v1033
    %v1279 = vpack.c.b16 %v1036, %v1035
    %v1280 = vpack.c.b16 %v1038, %v1037
    %v1281 = vpack.c.b16 %v1040, %v1039
    %v1282 = vpack.c.b16 %v1042, %v1041
    %v1283 = vpack.c.b16 %v1044, %v1043
    %v1284 = vpack.c.b16 %v1046, %v1045
    %v1285 = vpack.c.b16 %v1048, %v1047
    %v1286 = vpack.c.b16 %v1050, %v1049
    %v1287 = vpack.c.b16 %v1052, %v1051
    %v1288 = vpack.c.b16 %v1054, %v1053
    %v1289 = vpack.c.b16 %v1056, %v1055
    %v1290 = vpack.c.b16 %v1058, %v1057
    %v1291 = vpack.c.b16 %v1060, %v1059
    %v1292 = vpack.c.b16 %v1062, %v1061
    %v1293 = vpack.c.b16 %v1064, %v1063
    %v1294 = vpack.c.b16 %v1066, %v1065
    %v1295 = vpack.c.b16 %v1068, %v1067
    %v1296 = vpack.c.b16 %v1070, %v1069
    %v1297 = vpack.c.b16 %v1072, %v1071
    %v1298 = vpack.c.b16 %v1074, %v1073
    %v1299 = vpack.c.b16 %v1076, %v1075
    %v1300 = vpack.c.b16 %v1078, %v1077
    %v1301 = vpack.c.b16 %v1080, %v1079
    %v1302 = vpack.c.b16 %v1082, %v1081
    %v1303 = vpack.c.b16 %v1084, %v1083
    %v1304 = vpack.c.b16 %v1086, %v1085
    %v1305 = vpack.c.b16 %v1088, %v1087
    %v1306 = vpack.c.b16 %v1090, %v1089
    %v1307 = vpack.c.b16 %v1092, %v1091
    %v1308 = vpack.c.b16 %v1094, %v1093
    %v1309 = vpack.c.b16 %v1096, %v1095
    %v1310 = vpack.c.b16 %v1098, %v1097
    %v1311 = vpack.c.b16 %v1100, %v1099
    %v1312 = vpack.c.b16 %v1102, %v1101
    %v1313 = vpack.c.b16 %v1104, %v1103
    %v1314 = vpack.c.b16 %v1106, %v1105
    %v1315 = vpack.c.b16 %v1108, %v1107
    %v1316 = vpack.c.b16 %v1110, %v1109
    %v1317 = vpack.c.b16 %v1112, %v1111
    %v1318 = vpack.c.b16 %v1114, %v1113
    %v1319 = vpack.c.b16 %v1116, %v1115
    %v1320 = vpack.c.b16 %v1118, %v1117
    %v1321 = vpack.c.b16 %v1120, %v1119
    %v1322 = vpack.c.b16 %v1122, %v1121
    %v1323 = vpack.c.b16 %v1124, %v1123
    %v1324 = vpack.c.b16 %v1126, %v1125
    %v1325 = vpack.c.b16 %v1128, %v1127
    %v1326 = vpack.c.b16 %v1130, %v1129
    %v1327 = vpack.c.b16 %v1132, %v1131
    %v1328 = vpack.c.b16 %v1134, %v1133
    %v1329 = vpack.c.b16 %v1136, %v1135
    %v1330 = vpack.c.b16 %v1138, %v1137
    %v1331 = vpack.c.b16 %v1140, %v1139
    %v1332 = vpack.c.b16 %v1142, %v1141
    %v1333 = vpack.c.b16 %v1144, %v1143
    %v1334 = vpack.c.b16 %v1146, %v1145
    %v1335 = vpack.c.b16 %v1148, %v1147
    %v1336 = vpack.c.b16 %v1150, %v1149
    %v1337 = vpack.c.b16 %v1152, %v1151
    %v1338 = vpack.c.b16 %v1154, %v1153
    %v1339 = vpack.c.b16 %v1156, %v1155
    %v1340 = vpack.c.b16 %v1158, %v1157
    %v1341 = vpack.c.b16 %v1160, %v1159
    %v1342 = vpack.c.b16 %v1162, %v1161
    %v1343 = vpack.c.b16 %v1164, %v1163
    %v1344 = vpack.c.b16 %v1166, %v1165
    %v1345 = vpack.c.b16 %v1168, %v1167
    %v1346 = vpack.c.b16 %v1170, %v1169
    %v1347 = vpack.c.b16 %v1172, %v1171
    %v1348 = vpack.c.b16 %v1174, %v1173
    %v1349 = vpack.c.b16 %v1176, %v1175
    %v1350 = vpack.c.b16 %v1178, %v1177
    %v1351 = vpack.c.b16 %v1180, %v1179
    %v1352 = vpack.c.b16 %v1182, %v1181
    %v1353 = vpack.c.b16 %v1184, %v1183
    %v1354 = vpack.c.b16 %v1186, %v1185
    %v1355 = vpack.c.b16 %v1188, %v1187
    %v1356 = vpack.c.b16 %v1190, %v1189
    %v1357 = vpack.c.b16 %v1192, %v1191
    %v1358 = vpack.c.b16 %v1194, %v1193
    %v1359 = vpack.c.b16 %v1196, %v1195
    %v1360 = vpack.c.b16 %v1198, %v1197
    %v1361 = vpack.c.b16 %v1200, %v1199
    %v1362 = vpack.c.b16 %v1202, %v1201
    %v1363 = vpack.c.b16 %v1204, %v1203
    %v1364 = vpack.c.b16 %v1206, %v1205
    %v1365 = vpack.c.b16 %v1208, %v1207
    %v1366 = vpack.c.b16 %v1210, %v1209
    %v1367 = vpack.c.b16 %v1212, %v1211
    %v1368 = vpack.c.b16 %v1214, %v1213
    %v1369 = vpack.c.b16 %v1216, %v1215
    %v1370 = vpack.c.b16 %v1218, %v1217
    %v1371 = vpack.c.b16 %v1220, %v1219
    %v1372 = vpack.c.b16 %v1222, %v1221
    %v1373 = vpack.c.b16 %v1224, %v1223
    %v1374 = vpack.c.b16 %v1226, %v1225
    %v1375 = vpack.c.b16 %v1228, %v1227
    %v1376 = vpack.c.b16 %v1230, %v1229
    %v1377 = vpack.c.b16 %v1232, %v1231
    %v1378 = vpack.c.b16 %v1234, %v1233
    %v1379 = vpack.c.b16 %v1236, %v1235
    %v1380 = vpack.c.b16 %v1238, %v1237
    %v1381 = vpack.c.b16 %v1240, %v1239
    %v1382 = vpack.c.b16 %v1242, %v1241
    %v1383 = vpack.c.b16 %v1244, %v1243
    %v1384 = vpack.c.b16 %v1246, %v1245
    %v1385 = vpack.c.b16 %v1248, %v1247
    %v1386 = vpack.c.b16 %v1250, %v1249
    %v1387 = vpack.c.b16 %v1252, %v1251
    %v1388 = vpack.c.b16 %v1254, %v1253
    %v1389 = vpack.c.b16 %v1256, %v1255
    %v1390 = vpack.c.b16 %v1258, %v1257
    %v1391 = vpack.c.b16 %v1260, %v1259
    %v1392 = vpack.c.b16 %v1262, %v1261
    %v1393 = vpack.c.b16 %v1264, %v1263
    %v1394 = vpack.c.b16 %v1266, %v1265
    %1523 = vmatpush.bf16.msra.mxu0 %v1274
    %1524 = vmatpush.bf16.msra.mxu0 %v1273
    %1525 = vmatpush.bf16.msra.mxu0 %v1272
    %1526 = vmatpush.bf16.msra.mxu0 %v1271
    %1527 = vmatpush.bf16.msra.mxu0 %v1270
    %1528 = vmatpush.bf16.msra.mxu0 %v1269
    %1529 = vmatpush.bf16.msra.mxu0 %v1268
    %1530 = vmatpush.bf16.msra.mxu0 %v1267
    %1531 = vmatmul.bf16.gmra.mxu0 %v723
    %v1532 = vpop.f32.mrf.mxu0
    %v1533 = vadd.f32 %v697, %v1532
    %v1534 = vpop.f32.mrf.mxu0
    %1535 = vdwg.mxu0
    %1536 = vmatpush.bf16.msra.mxu0 %v1282
    %1537 = vmatpush.bf16.msra.mxu0 %v1281
    %1538 = vmatpush.bf16.msra.mxu0 %v1280
    %1539 = vmatpush.bf16.msra.mxu0 %v1279
    %1540 = vmatpush.bf16.msra.mxu0 %v1278
    %1541 = vmatpush.bf16.msra.mxu0 %v1277
    %1542 = vmatpush.bf16.msra.mxu0 %v1276
    %1543 = vmatpush.bf16.msra.mxu0 %v1275
    %1544 = vmatmul.bf16.gmra.mxu0 %v724
    %v1545 = vpop.f32.mrf.mxu0
    %v1546 = vadd.f32 %v1533, %v1545
    %v1547 = vpop.f32.mrf.mxu0
    %1548 = vdwg.mxu0
    %1549 = vmatpush.bf16.msra.mxu0 %v1290
    %1550 = vmatpush.bf16.msra.mxu0 %v1289
    %1551 = vmatpush.bf16.msra.mxu0 %v1288
    %1552 = vmatpush.bf16.msra.mxu0 %v1287
    %1553 = vmatpush.bf16.msra.mxu0 %v1286
    %1554 = vmatpush.bf16.msra.mxu0 %v1285
    %1555 = vmatpush.bf16.msra.mxu0 %v1284
    %1556 = vmatpush.bf16.msra.mxu0 %v1283
    %1557 = vmatmul.bf16.gmra.mxu0 %v725
    %v1558 = vpop.f32.mrf.mxu0
    %v1559 = vadd.f32 %v1546, %v1558
    %v1560 = vpop.f32.mrf.mxu0
    %1561 = vdwg.mxu0
    %1562 = vmatpush.bf16.msra.mxu0 %v1298
    %1563 = vmatpush.bf16.msra.mxu0 %v1297
    %1564 = vmatpush.bf16.msra.mxu0 %v1296
    %1565 = vmatpush.bf16.msra.mxu0 %v1295
    %1566 = vmatpush.bf16.msra.mxu0 %v1294
    %1567 = vmatpush.bf16.msra.mxu0 %v1293
    %1568 = vmatpush.bf16.msra.mxu0 %v1292
    %1569 = vmatpush.bf16.msra.mxu0 %v1291
    %1570 = vmatmul.bf16.gmra.mxu0 %v726
    %v1571 = vpop.f32.mrf.mxu0
    %v1572 = vadd.f32 %v1559, %v1571
    %v1573 = vpop.f32.mrf.mxu0
    %1574 = vdwg.mxu0
    %1575 = vmatpush.bf16.msra.mxu0 %v1306
    %1576 = vmatpush.bf16.msra.mxu0 %v1305
    %1577 = vmatpush.bf16.msra.mxu0 %v1304
    %1578 = vmatpush.bf16.msra.mxu0 %v1303
    %1579 = vmatpush.bf16.msra.mxu0 %v1302
    %1580 = vmatpush.bf16.msra.mxu0 %v1301
    %1581 = vmatpush.bf16.msra.mxu0 %v1300
    %1582 = vmatpush.bf16.msra.mxu0 %v1299
    %1583 = vmatmul.bf16.gmra.mxu0 %v727
    %v1584 = vpop.f32.mrf.mxu0
    %v1585 = vadd.f32 %v1572, %v1584
    %v1586 = vpop.f32.mrf.mxu0
    %1587 = vdwg.mxu0
    %1588 = vmatpush.bf16.msra.mxu0 %v1314
    %1589 = vmatpush.bf16.msra.mxu0 %v1313
    %1590 = vmatpush.bf16.msra.mxu0 %v1312
    %1591 = vmatpush.bf16.msra.mxu0 %v1311
    %1592 = vmatpush.bf16.msra.mxu0 %v1310
    %1593 = vmatpush.bf16.msra.mxu0 %v1309
    %1594 = vmatpush.bf16.msra.mxu0 %v1308
    %1595 = vmatpush.bf16.msra.mxu0 %v1307
    %1596 = vmatmul.bf16.gmra.mxu0 %v728
    %v1597 = vpop.f32.mrf.mxu0
    %v1598 = vadd.f32 %v1585, %v1597
    %v1599 = vpop.f32.mrf.mxu0
    %1600 = vdwg.mxu0
    %1601 = vmatpush.bf16.msra.mxu0 %v1322
    %1602 = vmatpush.bf16.msra.mxu0 %v1321
    %1603 = vmatpush.bf16.msra.mxu0 %v1320
    %1604 = vmatpush.bf16.msra.mxu0 %v1319
    %1605 = vmatpush.bf16.msra.mxu0 %v1318
    %1606 = vmatpush.bf16.msra.mxu0 %v1317
    %1607 = vmatpush.bf16.msra.mxu0 %v1316
    %1608 = vmatpush.bf16.msra.mxu0 %v1315
    %1609 = vmatmul.bf16.gmra.mxu0 %v729
    %v1610 = vpop.f32.mrf.mxu0
    %v1611 = vadd.f32 %v1598, %v1610
    %v1612 = vpop.f32.mrf.mxu0
    %1613 = vdwg.mxu0
    %1614 = vmatpush.bf16.msra.mxu0 %v1330
    %1615 = vmatpush.bf16.msra.mxu0 %v1329
    %1616 = vmatpush.bf16.msra.mxu0 %v1328
    %1617 = vmatpush.bf16.msra.mxu0 %v1327
    %1618 = vmatpush.bf16.msra.mxu0 %v1326
    %1619 = vmatpush.bf16.msra.mxu0 %v1325
    %1620 = vmatpush.bf16.msra.mxu0 %v1324
    %1621 = vmatpush.bf16.msra.mxu0 %v1323
    %1622 = vmatmul.bf16.gmra.mxu0 %v730
    %v1623 = vpop.f32.mrf.mxu0
    %v1624 = vadd.f32 %v1611, %v1623
    %v1625 = vpop.f32.mrf.mxu0
    %1626 = vdwg.mxu0
    %1627 = vmatpush.bf16.msra.mxu0 %v1338
    %1628 = vmatpush.bf16.msra.mxu0 %v1337
    %1629 = vmatpush.bf16.msra.mxu0 %v1336
    %1630 = vmatpush.bf16.msra.mxu0 %v1335
    %1631 = vmatpush.bf16.msra.mxu0 %v1334
    %1632 = vmatpush.bf16.msra.mxu0 %v1333
    %1633 = vmatpush.bf16.msra.mxu0 %v1332
    %1634 = vmatpush.bf16.msra.mxu0 %v1331
    %1635 = vmatmul.bf16.gmra.mxu0 %v731
    %v1636 = vpop.f32.mrf.mxu0
    %v1637 = vadd.f32 %v1624, %v1636
    %v1638 = vpop.f32.mrf.mxu0
    %1639 = vdwg.mxu0
    %1640 = vmatpush.bf16.msra.mxu0 %v1346
    %1641 = vmatpush.bf16.msra.mxu0 %v1345
    %1642 = vmatpush.bf16.msra.mxu0 %v1344
    %1643 = vmatpush.bf16.msra.mxu0 %v1343
    %1644 = vmatpush.bf16.msra.mxu0 %v1342
    %1645 = vmatpush.bf16.msra.mxu0 %v1341
    %1646 = vmatpush.bf16.msra.mxu0 %v1340
    %1647 = vmatpush.bf16.msra.mxu0 %v1339
    %1648 = vmatmul.bf16.gmra.mxu0 %v732
    %v1649 = vpop.f32.mrf.mxu0
    %v1650 = vadd.f32 %v1637, %v1649
    %v1651 = vpop.f32.mrf.mxu0
    %1652 = vdwg.mxu0
    %1653 = vmatpush.bf16.msra.mxu0 %v1354
    %1654 = vmatpush.bf16.msra.mxu0 %v1353
    %1655 = vmatpush.bf16.msra.mxu0 %v1352
    %1656 = vmatpush.bf16.msra.mxu0 %v1351
    %1657 = vmatpush.bf16.msra.mxu0 %v1350
    %1658 = vmatpush.bf16.msra.mxu0 %v1349
    %1659 = vmatpush.bf16.msra.mxu0 %v1348
    %1660 = vmatpush.bf16.msra.mxu0 %v1347
    %1661 = vmatmul.bf16.gmra.mxu0 %v733
    %v1662 = vpop.f32.mrf.mxu0
    %v1663 = vadd.f32 %v1650, %v1662
    %v1664 = vpop.f32.mrf.mxu0
    %1665 = vdwg.mxu0
    %1666 = vmatpush.bf16.msra.mxu0 %v1362
    %1667 = vmatpush.bf16.msra.mxu0 %v1361
    %1668 = vmatpush.bf16.msra.mxu0 %v1360
    %1669 = vmatpush.bf16.msra.mxu0 %v1359
    %1670 = vmatpush.bf16.msra.mxu0 %v1358
    %1671 = vmatpush.bf16.msra.mxu0 %v1357
    %1672 = vmatpush.bf16.msra.mxu0 %v1356
    %1673 = vmatpush.bf16.msra.mxu0 %v1355
    %1674 = vmatmul.bf16.gmra.mxu0 %v734
    %v1675 = vpop.f32.mrf.mxu0
    %v1676 = vadd.f32 %v1663, %v1675
    %v1677 = vpop.f32.mrf.mxu0
    %1678 = vdwg.mxu0
    %1679 = vmatpush.bf16.msra.mxu0 %v1370
    %1680 = vmatpush.bf16.msra.mxu0 %v1369
    %1681 = vmatpush.bf16.msra.mxu0 %v1368
    %1682 = vmatpush.bf16.msra.mxu0 %v1367
    %1683 = vmatpush.bf16.msra.mxu0 %v1366
    %1684 = vmatpush.bf16.msra.mxu0 %v1365
    %1685 = vmatpush.bf16.msra.mxu0 %v1364
    %1686 = vmatpush.bf16.msra.mxu0 %v1363
    %1687 = vmatmul.bf16.gmra.mxu0 %v735
    %v1688 = vpop.f32.mrf.mxu0
    %v1689 = vadd.f32 %v1676, %v1688
    %v1690 = vpop.f32.mrf.mxu0
    %1691 = vdwg.mxu0
    %1692 = vmatpush.bf16.msra.mxu0 %v1378
    %1693 = vmatpush.bf16.msra.mxu0 %v1377
    %1694 = vmatpush.bf16.msra.mxu0 %v1376
    %1695 = vmatpush.bf16.msra.mxu0 %v1375
    %1696 = vmatpush.bf16.msra.mxu0 %v1374
    %1697 = vmatpush.bf16.msra.mxu0 %v1373
    %1698 = vmatpush.bf16.msra.mxu0 %v1372
    %1699 = vmatpush.bf16.msra.mxu0 %v1371
    %1700 = vmatmul.bf16.gmra.mxu0 %v736
    %v1701 = vpop.f32.mrf.mxu0
    %v1702 = vadd.f32 %v1689, %v1701
    %v1703 = vpop.f32.mrf.mxu0
    %1704 = vdwg.mxu0
    %1705 = vmatpush.bf16.msra.mxu0 %v1386
    %1706 = vmatpush.bf16.msra.mxu0 %v1385
    %1707 = vmatpush.bf16.msra.mxu0 %v1384
    %1708 = vmatpush.bf16.msra.mxu0 %v1383
    %1709 = vmatpush.bf16.msra.mxu0 %v1382
    %1710 = vmatpush.bf16.msra.mxu0 %v1381
    %1711 = vmatpush.bf16.msra.mxu0 %v1380
    %1712 = vmatpush.bf16.msra.mxu0 %v1379
    %1713 = vmatmul.bf16.gmra.mxu0 %v737
    %v1714 = vpop.f32.mrf.mxu0
    %v1715 = vadd.f32 %v1702, %v1714
    %v1716 = vpop.f32.mrf.mxu0
    %1717 = vdwg.mxu0
    %1718 = vmatpush.bf16.msra.mxu0 %v1394
    %1719 = vmatpush.bf16.msra.mxu0 %v1393
    %1720 = vmatpush.bf16.msra.mxu0 %v1392
    %1721 = vmatpush.bf16.msra.mxu0 %v1391
    %1722 = vmatpush.bf16.msra.mxu0 %v1390
    %1723 = vmatpush.bf16.msra.mxu0 %v1389
    %1724 = vmatpush.bf16.msra.mxu0 %v1388
    %1725 = vmatpush.bf16.msra.mxu0 %v1387
    %1726 = vmatmul.bf16.gmra.mxu0 %v738
    %v1727 = vpop.f32.mrf.mxu0
    %v1728 = vadd.f32 %v1715, %v1727
    %v1729 = vpop.f32.mrf.mxu0
    %1730 = vdwg.mxu0
    %v1731 = vmax.f32 %v1728, 0.0
    %v1732 = vpack.c.bf16 %v1731, %v1731
    %v1733 = vld [vmem:[%s6] sm:$0xf]
    %v1734 = vld [vmem:[%s6 + $0x4] sm:$0xf]
    %v1735 = vld [vmem:[%s6 + $0x8] sm:$0xf]
    %v1736 = vld [vmem:[%s6 + $0xc] sm:$0xf]
    %v1737 = vld [vmem:[%s6 + $0x10] sm:$0xf]
    %v1738 = vld [vmem:[%s6 + $0x14] sm:$0xf]
    %v1739 = vld [vmem:[%s6 + $0x18] sm:$0xf]
    %v1740 = vld [vmem:[%s6 + $0x1c] sm:$0xf]
    %v1741 = vld [vmem:[%s7] sm:$0x1]
    %v1743 = vperm.slane %v1741, 0
    %v1753 = vunpack.c.l.b16 %v1733
    %v1754 = vunpack.c.l.b16 %v1734
    %v1755 = vunpack.c.l.b16 %v1735
    %v1756 = vunpack.c.l.b16 %v1736
    %v1757 = vunpack.c.l.b16 %v1737
    %v1758 = vunpack.c.l.b16 %v1738
    %v1759 = vunpack.c.l.b16 %v1739
    %v1760 = vunpack.c.l.b16 %v1740
    %v1761 = vpack.c.b16 %v1754, %v1753
    %v1762 = vpack.c.b16 %v1756, %v1755
    %v1763 = vpack.c.b16 %v1758, %v1757
    %v1764 = vpack.c.b16 %v1760, %v1759
    %vm1769 = vcmask 523264
    %v1771 = vsel %vm1769, %v1732, 0
    %1773 = vmatpush.bf16.msra.mxu0 0
    %1774 = vmatpush.bf16.msra.mxu0 0
    %1775 = vmatpush.bf16.msra.mxu0 0
    %1776 = vmatpush.bf16.msra.mxu0 0
    %1777 = vmatpush.bf16.msra.mxu0 %v1764
    %1778 = vmatpush.bf16.msra.mxu0 %v1763
    %1779 = vmatpush.bf16.msra.mxu0 %v1762
    %1780 = vmatpush.bf16.msra.mxu0 %v1761
    %1781 = vmatmul.bf16.gmra.mxu0 %v1771
    %v1782 = vpop.f32.mrf.mxu0
    %v1783 = vadd.f32 %v1743, %v1782
    %v1784 = vpop.f32.mrf.mxu0
    %1785 = vdwg.mxu0
    %1786 = vst [vmem:[%s8] sm:$0xff] %v1783
    // Predicated region
    $region42: #{social_cnn_forward.1} parent=1 // pred_check
      _
    $region43: #{social_cnn_forward.1} parent=1 // pred_check_branch
      %1788 = sbr.rel (0) target = $region45
    $region44: #{social_cnn_forward.1} parent=1 // pred_region
      _
    $region45: #{social_cnn_forward.1} parent=1 // pred_fallthru
      _
    // Predicated region
    $region46: #{social_cnn_forward.1} parent=1 // pred_check
      _
    $region47: #{social_cnn_forward.1} parent=1 // pred_check_branch
      %1790 = sbr.rel (0) target = $region49
    $region48: #{social_cnn_forward.1} parent=1 // pred_region
      _
    $region49: #{social_cnn_forward.1} parent=1 // pred_fallthru
      _
    %1791 = vsyncpa [#allocation4], 1
    %1792 = vsyncpa [#allocation6], 1

</llo_original>
